<compile_context>
chip_gen: v5e
topology: v5e:2x2
jax: 0.10.0
libtpu: 0.0.40
codegen_flags: <defaults>
</compile_context>

<pallas_src>
import jax
import jax.numpy as jnp
from jax import lax
from jax.experimental import pallas as pl
from jax.experimental.pallas import tpu as pltpu

BN_EPS = 1e-5


# --------------------------------------------------------------------------- kernels
def _conv_tile(x_refs, w_ref):
    """Accumulate the 3x3 conv for one tile of output rows.

    x_refs: three refs (row-taps kh = 0, 1, 2), each (TR, W+2, Cin) bf16.
    w_ref : (9, Cin, Cout_pad) bf16, tap-major (kh*3 + kw).
    returns: (TR*W, Cout_pad) f32 accumulator.
    """
    tr, wp2, cin = x_refs[0].shape
    wimg = wp2 - 2
    cout_pad = w_ref.shape[-1]
    acc = jnp.zeros((tr * wimg, cout_pad), jnp.float32)
    for i in range(3):            # kernel row tap
        for j in range(3):        # kernel column tap (static sublane-offset slice)
            win = x_refs[i][:, j:j + wimg, :]          # (TR, W, Cin) bf16
            # Layout-preserving collapse (W is a multiple of 8): rows stay rows.
            win = win.reshape(tr * wimg, cin)
            acc = acc + jnp.dot(win, w_ref[i * 3 + j],
                                preferred_element_type=jnp.float32)
    return acc


def _stats_kernel(x0_ref, x1_ref, x2_ref, w_ref, stats_ref):
    """Pass 1: per-tile conv + per-channel (sum, sum-of-squares) partials."""
    acc = _conv_tile((x0_ref, x1_ref, x2_ref), w_ref)          # (TM, Cout_pad) f32
    cout_pad = acc.shape[-1]
    s1 = jnp.sum(acc, axis=0, keepdims=True)                   # (1, Cout_pad)
    s2 = jnp.sum(acc * acc, axis=0, keepdims=True)             # (1, Cout_pad)
    stats_ref[...] = jnp.concatenate([s1, s2], axis=0).reshape(1, 2, cout_pad)


def _apply_kernel(x0_ref, x1_ref, x2_ref, w_ref, scale_ref, shift_ref, o_ref):
    """Pass 2: recompute conv tile, apply folded BN scale/shift, ReLU, store."""
    acc = _conv_tile((x0_ref, x1_ref, x2_ref), w_ref)          # (TM, Cout_pad) f32
    y = acc * scale_ref[...] + shift_ref[...]
    o_ref[...] = jnp.maximum(y, 0.0).astype(o_ref.dtype)


# --------------------------------------------------------------------------- wrapper
def conv_norm_act(x_nchw, weight_oihw, bias, gamma, beta, *, padding=1,
                  tm_target=1024):
    """Forward of ConvNormAct: (N, Cin, H, W) -> (N, Cout, H, W)."""
    n, cin, h, w = x_nchw.shape
    cout, cin_w, kh, kw = weight_oihw.shape
    assert cin == cin_w
    # TODO(synk): generalize beyond the 3x3 / stride-1 / pad-1 config and to W % 8 != 0
    # (the in-kernel window collapse assumes W is a sublane multiple).
    assert (kh, kw) == (3, 3) and padding == 1, "kernel specialized to 3x3, s=1, p=1"
    assert w % 8 == 0, "W must be a multiple of 8 for the in-kernel window reshape"
    # Conv bias is cancelled exactly by training-mode BN mean subtraction -> drop it.
    del bias

    lane = 128
    cout_pad = ((cout + lane - 1) // lane) * lane

    # ---- glue: NCHW -> NHWC bf16, zero-pad spatially, three row-shifted views ----
    x_nhwc = jnp.transpose(x_nchw, (0, 2, 3, 1)).astype(jnp.bfloat16)
    x_pad = jnp.pad(x_nhwc, ((0, 0), (1, 1), (1, 1), (0, 0)))     # (N, H+2, W+2, Cin)
    nr = n * h
    xrows = tuple(x_pad[:, i:i + h].reshape(nr, w + 2, cin) for i in range(3))

    # weight OIHW -> (kh*kw, Cin, Cout_pad), tap-major, bf16.
    w_taps = jnp.transpose(weight_oihw, (2, 3, 1, 0)).reshape(9, cin, cout)
    w_taps = jnp.pad(w_taps, ((0, 0), (0, 0), (0, cout_pad - cout))).astype(jnp.bfloat16)

    gamma_p = jnp.pad(gamma.astype(jnp.float32), (0, cout_pad - cout))
    beta_p = jnp.pad(beta.astype(jnp.float32), (0, cout_pad - cout))

    # ---- tiling: TR image-rows (= TR*W output rows) per grid step ----
    tr = max(1, min(nr, max(1, tm_target // w)))
    while tr > 1 and nr % tr:
        tr -= 1
    num_tiles = nr // tr
    tm = tr * w
    m = nr * w

    x_spec = pl.BlockSpec((tr, w + 2, cin), lambda t: (t, 0, 0))
    w_spec = pl.BlockSpec((9, cin, cout_pad), lambda t: (0, 0, 0))
    vec_spec = pl.BlockSpec((1, cout_pad), lambda t: (0, 0))
    cparams = pltpu.CompilerParams(dimension_semantics=("parallel",))

    # ---- pass 1: per-tile conv + partial BN statistics ----
    stats = pl.pallas_call(
        _stats_kernel,
        grid=(num_tiles,),
        in_specs=[x_spec, x_spec, x_spec, w_spec],
        out_specs=pl.BlockSpec((1, 2, cout_pad), lambda t: (t, 0, 0)),
        out_shape=jax.ShapeDtypeStruct((num_tiles, 2, cout_pad), jnp.float32),
        compiler_params=cparams,
    )(*xrows, w_taps)

    sums = jnp.sum(stats, axis=0)                         # (2, Cout_pad) f32
    mean = sums[0] / m
    var = jnp.maximum(sums[1] / m - mean * mean, 0.0)     # biased variance (BN training)
    inv_std = lax.rsqrt(var + BN_EPS)
    scale = (gamma_p * inv_std).reshape(1, cout_pad)
    shift = (beta_p - mean * gamma_p * inv_std).reshape(1, cout_pad)

    # ---- pass 2: recompute conv tile, apply folded scale/shift + ReLU ----
    out = pl.pallas_call(
        _apply_kernel,
        grid=(num_tiles,),
        in_specs=[x_spec, x_spec, x_spec, w_spec, vec_spec, vec_spec],
        out_specs=pl.BlockSpec((tm, cout_pad), lambda t: (t, 0)),
        out_shape=jax.ShapeDtypeStruct((m, cout_pad), jnp.float32),
        compiler_params=cparams,
    )(*xrows, w_taps, scale, shift)

    # ---- glue: drop channel padding, back to PyTorch NCHW ----
    return jnp.transpose(out[:, :cout].reshape(n, h, w, cout), (0, 3, 1, 2))


# --------------------------------------------------------------------------- reference
def _reference(x_nchw, weight_oihw, bias, gamma, beta, *, padding=1):
    """Pure-JAX f32 reference (Conv2d + training-mode BatchNorm2d + ReLU)."""
    y = lax.conv_general_dilated(
        x_nchw, weight_oihw, window_strides=(1, 1),
        padding=[(padding, padding), (padding, padding)],
        dimension_numbers=("NCHW", "OIHW", "NCHW"),
        precision=lax.Precision.HIGHEST)
    y = y + bias[None, :, None, None]
    mean = jnp.mean(y, axis=(0, 2, 3), keepdims=True)
    var = jnp.mean(jnp.square(y - mean), axis=(0, 2, 3), keepdims=True)
    y = (y - mean) * lax.rsqrt(var + BN_EPS)
    y = y * gamma[None, :, None, None] + beta[None, :, None, None]
    return jnp.maximum(y, 0.0)


if __name__ == "__main__":
    key = jax.random.PRNGKey(0)
    kx, kw_, kb, kg, kbt = jax.random.split(key, 5)

    # ConvNormAct(4, 8, kernel_size=3, padding=1) on a small NCHW input.
    N, Cin, H, W = 2, 4, 16, 16
    Cout, K, PAD = 8, 3, 1

    x = jax.random.normal(kx, (N, Cin, H, W), jnp.float32)
    weight = 0.1 * jax.random.normal(kw_, (Cout, Cin, K, K), jnp.float32)
    bias = 0.1 * jax.random.normal(kb, (Cout,), jnp.float32)
    gamma = 1.0 + 0.1 * jax.random.normal(kg, (Cout,), jnp.float32)
    beta = 0.1 * jax.random.normal(kbt, (Cout,), jnp.float32)

    # tm_target=128 -> 4 grid tiles on this small problem (exercises the pipelined
    # grid and the cross-tile BN statistics accumulation).
    out = conv_norm_act(x, weight, bias, gamma, beta, padding=PAD, tm_target=128)
    out = jax.block_until_ready(out)
    assert out.shape == (N, Cout, H, W)

    # Strict check vs. a reference using the same bf16 input/weight quantization
    # as the kernel's MXU path (only accumulation-order differences remain).
    ref_bf16 = _reference(x.astype(jnp.bfloat16).astype(jnp.float32),
                          weight.astype(jnp.bfloat16).astype(jnp.float32),
                          bias, gamma, beta, padding=PAD)
    assert jnp.allclose(out, ref_bf16, atol=1e-3, rtol=1e-3), "mismatch vs bf16 reference"

    # Looser check vs. the full-f32 reference (the PyTorch module semantics);
    # slack covers the bf16 MXU input quantization.
    ref_f32 = _reference(x, weight, bias, gamma, beta, padding=PAD)
    assert jnp.allclose(out, ref_f32, atol=5e-2, rtol=5e-2), "mismatch vs f32 reference"

    print("KERNEL_OK")
</pallas_src>

<mosaic_0001>
module attributes {stable_mosaic.version = 11 : i64} {
  func.func @_stats_kernel(%arg0: i32, %arg1: memref<8x18x4xbf16, #tpu.memory_space<vmem>>, %arg2: memref<8x18x4xbf16, #tpu.memory_space<vmem>>, %arg3: memref<8x18x4xbf16, #tpu.memory_space<vmem>>, %arg4: memref<9x4x128xbf16, #tpu.memory_space<vmem>>, %arg5: memref<1x2x128xf32, #tpu.memory_space<vmem>>) attributes {dimension_semantics = [#tpu.dimension_semantics<parallel>], iteration_bounds = array<i64: 4>, scalar_prefetch = 0 : i64, scratch_operands = 0 : i64, tpu.core_type = #tpu.core_type<tc>, window_params = [{transform_indices = @transform_0, window_bounds = array<i64: 8, 18, 4>}, {transform_indices = @transform_1, window_bounds = array<i64: 8, 18, 4>}, {transform_indices = @transform_2, window_bounds = array<i64: 8, 18, 4>}, {pipeline_mode = #tpu.pipeline_mode<synchronous>, transform_indices = @transform_3, window_bounds = array<i64: 9, 4, 128>}, {transform_indices = @transform_4, window_bounds = array<i64: 1, 2, 128>}]} {
    %cst = arith.constant 0.000000e+00 : f32
    %0 = vector.broadcast %cst : f32 to vector<128x128xf32>
    %c0 = arith.constant 0 : index
    %c0_0 = arith.constant 0 : index
    %c0_1 = arith.constant 0 : index
    %1 = vector.load %arg1[%c0, %c0_0, %c0_1] : memref<8x18x4xbf16, #tpu.memory_space<vmem>>, vector<8x16x4xbf16>
    %2 = vector.shape_cast %1 : vector<8x16x4xbf16> to vector<128x4xbf16>
    %c0_2 = arith.constant 0 : index
    %c0_3 = arith.constant 0 : index
    %c0_4 = arith.constant 0 : index
    %3 = vector.load %arg4[%c0_2, %c0_3, %c0_4] : memref<9x4x128xbf16, #tpu.memory_space<vmem>>, vector<1x4x128xbf16>
    %4 = vector.shape_cast %3 : vector<1x4x128xbf16> to vector<4x128xbf16>
    %cst_5 = arith.constant dense<0.000000e+00> : vector<128x128xf32>
    %5 = tpu.matmul %2, %4, %cst_5 {dimension_numbers = #tpu.dot_dimension_numbers<[1], [0], [0], [1], [0, 0, 1, 1], [], []>} : vector<128x4xbf16>, vector<4x128xbf16>, vector<128x128xf32> -> vector<128x128xf32>
    %6 = arith.addf %0, %5 : vector<128x128xf32>
    %c0_6 = arith.constant 0 : index
    %c1 = arith.constant 1 : index
    %c0_7 = arith.constant 0 : index
    %7 = vector.load %arg1[%c0_6, %c1, %c0_7] : memref<8x18x4xbf16, #tpu.memory_space<vmem>>, vector<8x16x4xbf16>
    %8 = vector.shape_cast %7 : vector<8x16x4xbf16> to vector<128x4xbf16>
    %c1_8 = arith.constant 1 : index
    %c0_9 = arith.constant 0 : index
    %c0_10 = arith.constant 0 : index
    %9 = vector.load %arg4[%c1_8, %c0_9, %c0_10] : memref<9x4x128xbf16, #tpu.memory_space<vmem>>, vector<1x4x128xbf16>
    %10 = vector.shape_cast %9 : vector<1x4x128xbf16> to vector<4x128xbf16>
    %cst_11 = arith.constant dense<0.000000e+00> : vector<128x128xf32>
    %11 = tpu.matmul %8, %10, %cst_11 {dimension_numbers = #tpu.dot_dimension_numbers<[1], [0], [0], [1], [0, 0, 1, 1], [], []>} : vector<128x4xbf16>, vector<4x128xbf16>, vector<128x128xf32> -> vector<128x128xf32>
    %12 = arith.addf %6, %11 : vector<128x128xf32>
    %c0_12 = arith.constant 0 : index
    %c2 = arith.constant 2 : index
    %c0_13 = arith.constant 0 : index
    %13 = vector.load %arg1[%c0_12, %c2, %c0_13] : memref<8x18x4xbf16, #tpu.memory_space<vmem>>, vector<8x16x4xbf16>
    %14 = vector.shape_cast %13 : vector<8x16x4xbf16> to vector<128x4xbf16>
    %c2_14 = arith.constant 2 : index
    %c0_15 = arith.constant 0 : index
    %c0_16 = arith.constant 0 : index
    %15 = vector.load %arg4[%c2_14, %c0_15, %c0_16] : memref<9x4x128xbf16, #tpu.memory_space<vmem>>, vector<1x4x128xbf16>
    %16 = vector.shape_cast %15 : vector<1x4x128xbf16> to vector<4x128xbf16>
    %cst_17 = arith.constant dense<0.000000e+00> : vector<128x128xf32>
    %17 = tpu.matmul %14, %16, %cst_17 {dimension_numbers = #tpu.dot_dimension_numbers<[1], [0], [0], [1], [0, 0, 1, 1], [], []>} : vector<128x4xbf16>, vector<4x128xbf16>, vector<128x128xf32> -> vector<128x128xf32>
    %18 = arith.addf %12, %17 : vector<128x128xf32>
    %c0_18 = arith.constant 0 : index
    %c0_19 = arith.constant 0 : index
    %c0_20 = arith.constant 0 : index
    %19 = vector.load %arg2[%c0_18, %c0_19, %c0_20] : memref<8x18x4xbf16, #tpu.memory_space<vmem>>, vector<8x16x4xbf16>
    %20 = vector.shape_cast %19 : vector<8x16x4xbf16> to vector<128x4xbf16>
    %c3 = arith.constant 3 : index
    %c0_21 = arith.constant 0 : index
    %c0_22 = arith.constant 0 : index
    %21 = vector.load %arg4[%c3, %c0_21, %c0_22] : memref<9x4x128xbf16, #tpu.memory_space<vmem>>, vector<1x4x128xbf16>
    %22 = vector.shape_cast %21 : vector<1x4x128xbf16> to vector<4x128xbf16>
    %cst_23 = arith.constant dense<0.000000e+00> : vector<128x128xf32>
    %23 = tpu.matmul %20, %22, %cst_23 {dimension_numbers = #tpu.dot_dimension_numbers<[1], [0], [0], [1], [0, 0, 1, 1], [], []>} : vector<128x4xbf16>, vector<4x128xbf16>, vector<128x128xf32> -> vector<128x128xf32>
    %24 = arith.addf %18, %23 : vector<128x128xf32>
    %c0_24 = arith.constant 0 : index
    %c1_25 = arith.constant 1 : index
    %c0_26 = arith.constant 0 : index
    %25 = vector.load %arg2[%c0_24, %c1_25, %c0_26] : memref<8x18x4xbf16, #tpu.memory_space<vmem>>, vector<8x16x4xbf16>
    %26 = vector.shape_cast %25 : vector<8x16x4xbf16> to vector<128x4xbf16>
    %c4 = arith.constant 4 : index
    %c0_27 = arith.constant 0 : index
    %c0_28 = arith.constant 0 : index
    %27 = vector.load %arg4[%c4, %c0_27, %c0_28] : memref<9x4x128xbf16, #tpu.memory_space<vmem>>, vector<1x4x128xbf16>
    %28 = vector.shape_cast %27 : vector<1x4x128xbf16> to vector<4x128xbf16>
    %cst_29 = arith.constant dense<0.000000e+00> : vector<128x128xf32>
    %29 = tpu.matmul %26, %28, %cst_29 {dimension_numbers = #tpu.dot_dimension_numbers<[1], [0], [0], [1], [0, 0, 1, 1], [], []>} : vector<128x4xbf16>, vector<4x128xbf16>, vector<128x128xf32> -> vector<128x128xf32>
    %30 = arith.addf %24, %29 : vector<128x128xf32>
    %c0_30 = arith.constant 0 : index
    %c2_31 = arith.constant 2 : index
    %c0_32 = arith.constant 0 : index
    %31 = vector.load %arg2[%c0_30, %c2_31, %c0_32] : memref<8x18x4xbf16, #tpu.memory_space<vmem>>, vector<8x16x4xbf16>
    %32 = vector.shape_cast %31 : vector<8x16x4xbf16> to vector<128x4xbf16>
    %c5 = arith.constant 5 : index
    %c0_33 = arith.constant 0 : index
    %c0_34 = arith.constant 0 : index
    %33 = vector.load %arg4[%c5, %c0_33, %c0_34] : memref<9x4x128xbf16, #tpu.memory_space<vmem>>, vector<1x4x128xbf16>
    %34 = vector.shape_cast %33 : vector<1x4x128xbf16> to vector<4x128xbf16>
    %cst_35 = arith.constant dense<0.000000e+00> : vector<128x128xf32>
    %35 = tpu.matmul %32, %34, %cst_35 {dimension_numbers = #tpu.dot_dimension_numbers<[1], [0], [0], [1], [0, 0, 1, 1], [], []>} : vector<128x4xbf16>, vector<4x128xbf16>, vector<128x128xf32> -> vector<128x128xf32>
    %36 = arith.addf %30, %35 : vector<128x128xf32>
    %c0_36 = arith.constant 0 : index
    %c0_37 = arith.constant 0 : index
    %c0_38 = arith.constant 0 : index
    %37 = vector.load %arg3[%c0_36, %c0_37, %c0_38] : memref<8x18x4xbf16, #tpu.memory_space<vmem>>, vector<8x16x4xbf16>
    %38 = vector.shape_cast %37 : vector<8x16x4xbf16> to vector<128x4xbf16>
    %c6 = arith.constant 6 : index
    %c0_39 = arith.constant 0 : index
    %c0_40 = arith.constant 0 : index
    %39 = vector.load %arg4[%c6, %c0_39, %c0_40] : memref<9x4x128xbf16, #tpu.memory_space<vmem>>, vector<1x4x128xbf16>
    %40 = vector.shape_cast %39 : vector<1x4x128xbf16> to vector<4x128xbf16>
    %cst_41 = arith.constant dense<0.000000e+00> : vector<128x128xf32>
    %41 = tpu.matmul %38, %40, %cst_41 {dimension_numbers = #tpu.dot_dimension_numbers<[1], [0], [0], [1], [0, 0, 1, 1], [], []>} : vector<128x4xbf16>, vector<4x128xbf16>, vector<128x128xf32> -> vector<128x128xf32>
    %42 = arith.addf %36, %41 : vector<128x128xf32>
    %c0_42 = arith.constant 0 : index
    %c1_43 = arith.constant 1 : index
    %c0_44 = arith.constant 0 : index
    %43 = vector.load %arg3[%c0_42, %c1_43, %c0_44] : memref<8x18x4xbf16, #tpu.memory_space<vmem>>, vector<8x16x4xbf16>
    %44 = vector.shape_cast %43 : vector<8x16x4xbf16> to vector<128x4xbf16>
    %c7 = arith.constant 7 : index
    %c0_45 = arith.constant 0 : index
    %c0_46 = arith.constant 0 : index
    %45 = vector.load %arg4[%c7, %c0_45, %c0_46] : memref<9x4x128xbf16, #tpu.memory_space<vmem>>, vector<1x4x128xbf16>
    %46 = vector.shape_cast %45 : vector<1x4x128xbf16> to vector<4x128xbf16>
    %cst_47 = arith.constant dense<0.000000e+00> : vector<128x128xf32>
    %47 = tpu.matmul %44, %46, %cst_47 {dimension_numbers = #tpu.dot_dimension_numbers<[1], [0], [0], [1], [0, 0, 1, 1], [], []>} : vector<128x4xbf16>, vector<4x128xbf16>, vector<128x128xf32> -> vector<128x128xf32>
    %48 = arith.addf %42, %47 : vector<128x128xf32>
    %c0_48 = arith.constant 0 : index
    %c2_49 = arith.constant 2 : index
    %c0_50 = arith.constant 0 : index
    %49 = vector.load %arg3[%c0_48, %c2_49, %c0_50] : memref<8x18x4xbf16, #tpu.memory_space<vmem>>, vector<8x16x4xbf16>
    %50 = vector.shape_cast %49 : vector<8x16x4xbf16> to vector<128x4xbf16>
    %c8 = arith.constant 8 : index
    %c0_51 = arith.constant 0 : index
    %c0_52 = arith.constant 0 : index
    %51 = vector.load %arg4[%c8, %c0_51, %c0_52] : memref<9x4x128xbf16, #tpu.memory_space<vmem>>, vector<1x4x128xbf16>
    %52 = vector.shape_cast %51 : vector<1x4x128xbf16> to vector<4x128xbf16>
    %cst_53 = arith.constant dense<0.000000e+00> : vector<128x128xf32>
    %53 = tpu.matmul %50, %52, %cst_53 {dimension_numbers = #tpu.dot_dimension_numbers<[1], [0], [0], [1], [0, 0, 1, 1], [], []>} : vector<128x4xbf16>, vector<4x128xbf16>, vector<128x128xf32> -> vector<128x128xf32>
    %54 = arith.addf %48, %53 : vector<128x128xf32>
    %cst_54 = arith.constant dense<0.000000e+00> : vector<128xf32>
    %55 = vector.multi_reduction <add>, %54, %cst_54 [0] : vector<128x128xf32> to vector<128xf32>
    %56 = vector.shape_cast %55 : vector<128xf32> to vector<1x128xf32>
    %57 = arith.mulf %54, %54 : vector<128x128xf32>
    %cst_55 = arith.constant dense<0.000000e+00> : vector<128xf32>
    %58 = vector.multi_reduction <add>, %57, %cst_55 [0] : vector<128x128xf32> to vector<128xf32>
    %59 = vector.shape_cast %58 : vector<128xf32> to vector<1x128xf32>
    %60 = tpu.concatenate %56, %59 in 0 : vector<1x128xf32>, vector<1x128xf32> -> vector<2x128xf32>
    %61 = vector.shape_cast %60 : vector<2x128xf32> to vector<1x2x128xf32>
    %c0_56 = arith.constant 0 : index
    %c0_57 = arith.constant 0 : index
    %c0_58 = arith.constant 0 : index
    %62 = vector.load %arg5[%c0_56, %c0_57, %c0_58] : memref<1x2x128xf32, #tpu.memory_space<vmem>>, vector<1x2x128xf32>
    tpu.vector_store %arg5[%c0_56, %c0_57, %c0_58], %61 {strides = array<i32>} : memref<1x2x128xf32, #tpu.memory_space<vmem>>, vector<1x2x128xf32>,
    return
  }
  func.func @transform_0(%arg0: i32) -> (i32, i32, i32) {
    %c0_i32 = arith.constant 0 : i32
    %c0_i32_0 = arith.constant 0 : i32
    %c0_i32_1 = arith.constant 0 : i32
    return %arg0, %c0_i32, %c0_i32_0 : i32, i32, i32
  }
  func.func @transform_1(%arg0: i32) -> (i32, i32, i32) {
    %c0_i32 = arith.constant 0 : i32
    %c0_i32_0 = arith.constant 0 : i32
    %c0_i32_1 = arith.constant 0 : i32
    return %arg0, %c0_i32, %c0_i32_0 : i32, i32, i32
  }
  func.func @transform_2(%arg0: i32) -> (i32, i32, i32) {
    %c0_i32 = arith.constant 0 : i32
    %c0_i32_0 = arith.constant 0 : i32
    %c0_i32_1 = arith.constant 0 : i32
    return %arg0, %c0_i32, %c0_i32_0 : i32, i32, i32
  }
  func.func @transform_3(%arg0: i32) -> (i32, i32, i32) {
    %c0_i32 = arith.constant 0 : i32
    %c0_i32_0 = arith.constant 0 : i32
    %c0_i32_1 = arith.constant 0 : i32
    %c0_i32_2 = arith.constant 0 : i32
    return %c0_i32, %c0_i32_0, %c0_i32_1 : i32, i32, i32
  }
  func.func @transform_4(%arg0: i32) -> (i32, i32, i32) {
    %c0_i32 = arith.constant 0 : i32
    %c0_i32_0 = arith.constant 0 : i32
    %c0_i32_1 = arith.constant 0 : i32
    return %arg0, %c0_i32, %c0_i32_0 : i32, i32, i32
  }
}

</mosaic_0001>

<llo_original>
// kernel: tpu_custom_call.1
$region0: #{tpu_custom_call.1}
  #allocation0 [shape = 'u32[]', space=smem, size = 0x4, offset = 0x4, fixed_abs, tag = 'smem constant byte address 0x4 - core index']
  #allocation1 [shape = 'u32[72,128]{1,0:T(1,128)}', space=vmem, size = 0x9000, scoped, tag = 'internal scratch']
  %s0 = inlined_call_operand.vmem [shape: bf16[32,18,4], index: 0, kind: input, shape index: {}]
  %s1 = inlined_call_operand.vmem [shape: bf16[32,18,4], index: 1, kind: input, shape index: {}]
  %s2 = inlined_call_operand.vmem [shape: bf16[32,18,4], index: 2, kind: input, shape index: {}]
  %s3 = inlined_call_operand.vmem [shape: bf16[9,4,128], index: 3, kind: input, shape index: {}]
  %s4 = inlined_call_operand.hbm [shape: f32[4,2,128], index: 4, kind: output, shape index: {}]
  %s5 = sld [smem:[#allocation0]]
  $region49: #{tpu_custom_call.1} parent=0
    _
  %s7 = ssub.s32 1, %s5
  %s8 = scalar_select 0, %s7, %s5
  $region1: #{tpu_custom_call.1} parent=0
    #allocation2 [shape = 'u8[2048]{0}', space=vmem, size = 0x800, scoped, tag = 'output window, operand 0']
    #allocation3 [shape = 's32[2]{0}', space=sflag, size = 0x8, scoped, tag = 'scoped memory for tpu_custom_call.1']
    %9 = vsyncpa [#allocation3], 0
    %s10 = scalar_lea.sflag [#allocation3], 1
    %11 = vsyncpa %s10, 0
    loop: start=0, step=1, limit=6
    $region2: #{tpu_custom_call.1} parent=1 // loop_pre_header
      _
    $region3: #{tpu_custom_call.1} parent=1 // loop_header
      %s13 = sphi 0, %s17
      %p14 = scmp.ge.s32.totalorder %s13, 6
      %s23 = sphi 0, %s25
      %s26 = sphi 0, %s23
      %s27 = sphi 0, %s26
      %s43 = sphi 0, %s27
      %s49 = sphi 0, %s51
      %s52 = sphi 0, %s49
      %s53 = sphi 0, %s52
      %s69 = sphi 0, %s53
      %s75 = sphi 0, %s77
      %s78 = sphi 0, %s75
      %s79 = sphi 0, %s78
      %s95 = sphi 0, %s79
      %s99 = sphi 0, %s99
      %s101 = sphi 0, %s99
      %s102 = sphi 0, %s101
      %s116 = sphi 0, %s102
      %s122 = sphi 0, %s124
      %s125 = sphi 0, %s122
      %s126 = sphi 0, %s125
      %s142 = sphi 0, %s126
    $region4: #{tpu_custom_call.1} parent=1 // loop_header_branch
      %16 = sbr.rel (%p14) target = $region8
    $region5: #{tpu_custom_call.1} parent=1 // loop_body
      %s18 = ssub.s32 %s13, 1
      %s19 = ssub.s32 %s13, 2
      %s20 = sadd.s32 %s13, 1
      %s21 = ssub.s32 %s13, %s20
      %p22 = scmp.eq.s32.totalorder %s21, 0
      %s24 = sadd.s32 %s23, 1
      %s25 = scalar_select %p22, %s23, %s24
      %p28 = pneg %p22
      %p29 = scmp.eq.s32.totalorder %s13, 3
      %p30 = por %p28, %p29
      %p31 = scmp.ne.s32.totalorder %s23, %s26
      %p32 = scmp.eq.s32.totalorder %s13, 0
      %p33 = por %p31, %p32
      %p34 = scmp.ne.s32.totalorder %s23, %s26
      %p35 = scmp.eq.s32.totalorder %s18, 3
      %p36 = por %p34, %p35
      %p37 = scmp.ne.s32.totalorder %s26, %s27
      %p38 = scmp.eq.s32.totalorder %s18, 0
      %p39 = por %p37, %p38
      %p40 = scmp.ne.s32.totalorder %s26, %s27
      %p41 = scmp.eq.s32.totalorder %s19, 3
      %p42 = por %p40, %p41
      %p44 = scmp.ne.s32.totalorder %s27, %s43
      %p45 = scmp.eq.s32.totalorder %s19, 0
      %p46 = por %p44, %p45
      %s47 = ssub.s32 %s13, %s20
      %p48 = scmp.eq.s32.totalorder %s47, 0
      %s50 = sadd.s32 %s49, 1
      %s51 = scalar_select %p48, %s49, %s50
      %p54 = pneg %p48
      %p55 = scmp.eq.s32.totalorder %s13, 3
      %p56 = por %p54, %p55
      %p57 = scmp.ne.s32.totalorder %s49, %s52
      %p58 = scmp.eq.s32.totalorder %s13, 0
      %p59 = por %p57, %p58
      %p60 = scmp.ne.s32.totalorder %s49, %s52
      %p61 = scmp.eq.s32.totalorder %s18, 3
      %p62 = por %p60, %p61
      %p63 = scmp.ne.s32.totalorder %s52, %s53
      %p64 = scmp.eq.s32.totalorder %s18, 0
      %p65 = por %p63, %p64
      %p66 = scmp.ne.s32.totalorder %s52, %s53
      %p67 = scmp.eq.s32.totalorder %s19, 3
      %p68 = por %p66, %p67
      %p70 = scmp.ne.s32.totalorder %s53, %s69
      %p71 = scmp.eq.s32.totalorder %s19, 0
      %p72 = por %p70, %p71
      %s73 = ssub.s32 %s13, %s20
      %p74 = scmp.eq.s32.totalorder %s73, 0
      %s76 = sadd.s32 %s75, 1
      %s77 = scalar_select %p74, %s75, %s76
      %p80 = pneg %p74
      %p81 = scmp.eq.s32.totalorder %s13, 3
      %p82 = por %p80, %p81
      %p83 = scmp.ne.s32.totalorder %s75, %s78
      %p84 = scmp.eq.s32.totalorder %s13, 0
      %p85 = por %p83, %p84
      %p86 = scmp.ne.s32.totalorder %s75, %s78
      %p87 = scmp.eq.s32.totalorder %s18, 3
      %p88 = por %p86, %p87
      %p89 = scmp.ne.s32.totalorder %s78, %s79
      %p90 = scmp.eq.s32.totalorder %s18, 0
      %p91 = por %p89, %p90
      %p92 = scmp.ne.s32.totalorder %s78, %s79
      %p93 = scmp.eq.s32.totalorder %s19, 3
      %p94 = por %p92, %p93
      %p96 = scmp.ne.s32.totalorder %s79, %s95
      %p97 = scmp.eq.s32.totalorder %s19, 0
      %p98 = por %p96, %p97
      %s100 = sadd.s32 %s99, 1
      %p103 = scmp.eq.s32.totalorder %s13, 3
      %p104 = scmp.ne.s32.totalorder %s99, %s101
      %p105 = scmp.eq.s32.totalorder %s13, 0
      %p106 = por %p104, %p105
      %p107 = scmp.ne.s32.totalorder %s99, %s101
      %p108 = scmp.eq.s32.totalorder %s18, 3
      %p109 = por %p107, %p108
      %p110 = scmp.ne.s32.totalorder %s101, %s102
      %p111 = scmp.eq.s32.totalorder %s18, 0
      %p112 = por %p110, %p111
      %p113 = scmp.ne.s32.totalorder %s101, %s102
      %p114 = scmp.eq.s32.totalorder %s19, 3
      %p115 = por %p113, %p114
      %p117 = scmp.ne.s32.totalorder %s102, %s116
      %p118 = scmp.eq.s32.totalorder %s19, 0
      %p119 = por %p117, %p118
      %s120 = ssub.s32 %s13, %s20
      %p121 = scmp.eq.s32.totalorder %s120, 0
      %s123 = sadd.s32 %s122, 1
      %s124 = scalar_select %p121, %s122, %s123
      %p127 = pneg %p121
      %p128 = scmp.eq.s32.totalorder %s13, 3
      %p129 = por %p127, %p128
      %p130 = scmp.ne.s32.totalorder %s122, %s125
      %p131 = scmp.eq.s32.totalorder %s13, 0
      %p132 = por %p130, %p131
      %p133 = scmp.ne.s32.totalorder %s122, %s125
      %p134 = scmp.eq.s32.totalorder %s18, 3
      %p135 = por %p133, %p134
      %p136 = scmp.ne.s32.totalorder %s125, %s126
      %p137 = scmp.eq.s32.totalorder %s18, 0
      %p138 = por %p136, %p137
      %p139 = scmp.ne.s32.totalorder %s125, %s126
      %p140 = scmp.eq.s32.totalorder %s19, 3
      %p141 = por %p139, %p140
      %p143 = scmp.ne.s32.totalorder %s126, %s142
      %p144 = scmp.eq.s32.totalorder %s19, 0
      %p145 = por %p143, %p144
      %p146 = scmp.le.s32.totalorder 1, %s13
      %p147 = scmp.lt.s32.totalorder %s13, 5
      %p148 = pnand %p146, %p147
      %p149 = pneg %p148
      // Predicated region
      $region9: #{tpu_custom_call.1} parent=5 // pred_check
        _
      $region10: #{tpu_custom_call.1} parent=5 // pred_check_branch
        %151 = sbr.rel (%p148) target = $region12
      $region11: #{tpu_custom_call.1} parent=5 // pred_region
        %s152 = ssub.s32 %s13, 1
        // Predicated region
        $region13: #{tpu_custom_call.1} parent=11 // pred_check
          %p153 = pneg %p112
        $region14: #{tpu_custom_call.1} parent=11 // pred_check_branch
          %155 = sbr.rel (%p153) target = $region16
        $region15: #{tpu_custom_call.1} parent=11 // pred_region
          _
        $region16: #{tpu_custom_call.1} parent=11 // pred_fallthru
          _
      $region12: #{tpu_custom_call.1} parent=5 // pred_fallthru
        _
      %p156 = scmp.lt.s32.totalorder %s13, 4
      // Predicated region
      $region17: #{tpu_custom_call.1} parent=5 // pred_check
        %p157 = pneg %p156
      $region18: #{tpu_custom_call.1} parent=5 // pred_check_branch
        %159 = sbr.rel (%p157) target = $region20
      $region19: #{tpu_custom_call.1} parent=5 // pred_region
        // Predicated region
        $region21: #{tpu_custom_call.1} parent=19 // pred_check
          %p160 = pneg %p33
        $region22: #{tpu_custom_call.1} parent=19 // pred_check_branch
          %162 = sbr.rel (%p160) target = $region24
        $region23: #{tpu_custom_call.1} parent=19 // pred_region
          %s163 = smul.u32 8, %s13
          %p164 = scmp.lt.s32.totalorder %s163, 31
          %s165 = scalar_select %p164, %s163, 31
          %s166 = smul.addr %s165, 3
          %s167 = smul.addr %s166, 4
          %s168 = scalar_lea.vmem %s0, %s167
          %s169 = smul.u32 8, %s13
        $region24: #{tpu_custom_call.1} parent=19 // pred_fallthru
          _
        // Predicated region
        $region25: #{tpu_custom_call.1} parent=19 // pred_check
          %p170 = pneg %p59
        $region26: #{tpu_custom_call.1} parent=19 // pred_check_branch
          %172 = sbr.rel (%p170) target = $region28
        $region27: #{tpu_custom_call.1} parent=19 // pred_region
          %s173 = smul.u32 8, %s13
          %p174 = scmp.lt.s32.totalorder %s173, 31
          %s175 = scalar_select %p174, %s173, 31
          %s176 = smul.addr %s175, 3
          %s177 = smul.addr %s176, 4
          %s178 = scalar_lea.vmem %s1, %s177
          %s179 = smul.u32 8, %s13
        $region28: #{tpu_custom_call.1} parent=19 // pred_fallthru
          _
        // Predicated region
        $region29: #{tpu_custom_call.1} parent=19 // pred_check
          %p180 = pneg %p85
        $region30: #{tpu_custom_call.1} parent=19 // pred_check_branch
          %182 = sbr.rel (%p180) target = $region32
        $region31: #{tpu_custom_call.1} parent=19 // pred_region
          %s183 = smul.u32 8, %s13
          %p184 = scmp.lt.s32.totalorder %s183, 31
          %s185 = scalar_select %p184, %s183, 31
          %s186 = smul.addr %s185, 3
          %s187 = smul.addr %s186, 4
          %s188 = scalar_lea.vmem %s2, %s187
          %s189 = smul.u32 8, %s13
        $region32: #{tpu_custom_call.1} parent=19 // pred_fallthru
          _
      $region20: #{tpu_custom_call.1} parent=5 // pred_fallthru
        _
      %p190 = scmp.le.s32.totalorder 1, %s13
      %p191 = scmp.lt.s32.totalorder %s13, 5
      %p192 = pnand %p190, %p191
      %p193 = pneg %p192
      // Predicated region
      $region33: #{tpu_custom_call.1} parent=5 // pred_check
        _
      $region34: #{tpu_custom_call.1} parent=5 // pred_check_branch
        %195 = sbr.rel (%p192) target = $region36
      $region35: #{tpu_custom_call.1} parent=5 // pred_region
        %s196 = ssub.s32 %s13, 1
        %s197 = smul.u32 8, %s18
        %p198 = scmp.lt.s32.totalorder %s197, 31
        %s199 = scalar_select %p198, %s197, 31
        %s200 = smul.addr %s199, 3
        %s201 = smul.addr %s200, 4
        %s202 = scalar_lea.vmem %s0, %s201
        %p203 = pneg %p39
        %p204 = pneg %p36
        %s205 = smul.u32 8, %s18
        %p206 = scmp.lt.s32.totalorder %s205, 31
        %s207 = scalar_select %p206, %s205, 31
        %s208 = smul.addr %s207, 3
        %s209 = smul.addr %s208, 4
        %s210 = scalar_lea.vmem %s1, %s209
        %p211 = pneg %p65
        %p212 = pneg %p62
        %s213 = smul.u32 8, %s18
        %p214 = scmp.lt.s32.totalorder %s213, 31
        %s215 = scalar_select %p214, %s213, 31
        %s216 = smul.addr %s215, 3
        %s217 = smul.addr %s216, 4
        %s218 = scalar_lea.vmem %s2, %s217
        %p219 = pneg %p91
        %p220 = pneg %p88
        %p221 = pneg %p112
        %p222 = pneg %p109
        %p223 = pneg %p138
        %p224 = pneg %p135
        %s225 = sand.u32 %s125, 1
        %s226 = scalar_lea.sflag [#allocation3], %s225
        %s227 = sand.u32 %s125, 1
        %s228 = smul.addr %s227, 2
        %s229 = scalar_lea.vmem [#allocation2], %s228
        %s230 = smul.u32 8, %s18
        %p231 = scmp.lt.s32.totalorder %s230, 31
        %s232 = scalar_select %p231, %s230, 31
        %s233 = smul.addr %s232, 3
        %s234 = smul.addr %s233, 4
        %s235 = scalar_lea.vmem %s0, %s234
        %s236 = smul.u32 8, %s18
        %s237 = smul.u32 8, %s18
        %p238 = scmp.lt.s32.totalorder %s237, 31
        %s239 = scalar_select %p238, %s237, 31
        %s240 = smul.addr %s239, 3
        %s241 = smul.addr %s240, 4
        %s242 = scalar_lea.vmem %s1, %s241
        %s243 = smul.u32 8, %s18
        %s244 = smul.u32 8, %s18
        %p245 = scmp.lt.s32.totalorder %s244, 31
        %s246 = scalar_select %p245, %s244, 31
        %s247 = smul.addr %s246, 3
        %s248 = smul.addr %s247, 4
        %s249 = scalar_lea.vmem %s2, %s248
        %s250 = smul.u32 8, %s18
        %v252 = vld [vmem:[%s235] sm:$0xf]
        %v253 = vld [vmem:[%s235 + $0x4] sm:$0xf]
        %v254 = vld [vmem:[%s235 + $0xc] sm:$0xf]
        %v255 = vld [vmem:[%s235 + $0x10] sm:$0xf]
        %v256 = vld [vmem:[%s235 + $0x18] sm:$0xf]
        %v257 = vld [vmem:[%s235 + $0x1c] sm:$0xf]
        %v258 = vld [vmem:[%s235 + $0x24] sm:$0xf]
        %v259 = vld [vmem:[%s235 + $0x28] sm:$0xf]
        %v260 = vld [vmem:[%s235 + $0x30] sm:$0xf]
        %v261 = vld [vmem:[%s235 + $0x34] sm:$0xf]
        %v262 = vld [vmem:[%s235 + $0x3c] sm:$0xf]
        %v263 = vld [vmem:[%s235 + $0x40] sm:$0xf]
        %v264 = vld [vmem:[%s235 + $0x48] sm:$0xf]
        %v265 = vld [vmem:[%s235 + $0x4c] sm:$0xf]
        %v266 = vld [vmem:[%s235 + $0x54] sm:$0xf]
        %v267 = vld [vmem:[%s235 + $0x58] sm:$0xf]
        %v268 = vld [vmem:[%s3] sm:$0x3]
        %v269 = vld [vmem:[%s235 + $0x8] sm:$0x1]
        %v270 = vld [vmem:[%s235 + $0x14] sm:$0x1]
        %v271 = vld [vmem:[%s235 + $0x20] sm:$0x1]
        %v272 = vld [vmem:[%s235 + $0x2c] sm:$0x1]
        %v273 = vld [vmem:[%s235 + $0x38] sm:$0x1]
        %v274 = vld [vmem:[%s235 + $0x44] sm:$0x1]
        %v275 = vld [vmem:[%s235 + $0x50] sm:$0x1]
        %v276 = vld [vmem:[%s235 + $0x5c] sm:$0x1]
        %vm277 = vsmask.f32 3328
        %vm278 = vsmask.f32 7440
        %vm279 = vmor %vm277, %vm278
        %v281 = vshrl.u32 %v252, 16
        %v283 = vrot.slane %v281, 4
        %v284 = vshll.u32 %v252, 16
        %v286 = vrot.slane %v284, 5
        %v287 = vor.u32 %v283, %v286
        %v288 = vrot.slane %v287, 4
        %v290 = vshll.u32 %v253, 16
        %v292 = vrot.slane %v290, 5
        %v293 = vsel %vm279, %v288, %v292
        %v294 = vshrl.u32 %v253, 16
        %v296 = vrot.slane %v294, 4
        %v297 = vor.u32 %v296, %v292
        %v298 = vrot.slane %v297, 4
        %v300 = vshll.u32 %v269, 16
        %v302 = vrot.slane %v300, 5
        %v303 = vsel %vm279, %v298, %v302
        %v305 = vshrl.u32 %v254, 16
        %v307 = vrot.slane %v305, 4
        %v308 = vshll.u32 %v254, 16
        %v310 = vrot.slane %v308, 5
        %v311 = vor.u32 %v307, %v310
        %v312 = vrot.slane %v311, 4
        %v314 = vshll.u32 %v255, 16
        %v316 = vrot.slane %v314, 5
        %v317 = vsel %vm279, %v312, %v316
        %v318 = vshrl.u32 %v255, 16
        %v320 = vrot.slane %v318, 4
        %v321 = vor.u32 %v320, %v316
        %v322 = vrot.slane %v321, 4
        %v324 = vshll.u32 %v270, 16
        %v326 = vrot.slane %v324, 5
        %v327 = vsel %vm279, %v322, %v326
        %v329 = vshrl.u32 %v256, 16
        %v331 = vrot.slane %v329, 4
        %v332 = vshll.u32 %v256, 16
        %v334 = vrot.slane %v332, 5
        %v335 = vor.u32 %v331, %v334
        %v336 = vrot.slane %v335, 4
        %v338 = vshll.u32 %v257, 16
        %v340 = vrot.slane %v338, 5
        %v341 = vsel %vm279, %v336, %v340
        %v342 = vshrl.u32 %v257, 16
        %v344 = vrot.slane %v342, 4
        %v345 = vor.u32 %v344, %v340
        %v346 = vrot.slane %v345, 4
        %v348 = vshll.u32 %v271, 16
        %v350 = vrot.slane %v348, 5
        %v351 = vsel %vm279, %v346, %v350
        %v353 = vshrl.u32 %v258, 16
        %v355 = vrot.slane %v353, 4
        %v356 = vshll.u32 %v258, 16
        %v358 = vrot.slane %v356, 5
        %v359 = vor.u32 %v355, %v358
        %v360 = vrot.slane %v359, 4
        %v362 = vshll.u32 %v259, 16
        %v364 = vrot.slane %v362, 5
        %v365 = vsel %vm279, %v360, %v364
        %v366 = vshrl.u32 %v259, 16
        %v368 = vrot.slane %v366, 4
        %v369 = vor.u32 %v368, %v364
        %v370 = vrot.slane %v369, 4
        %v372 = vshll.u32 %v272, 16
        %v374 = vrot.slane %v372, 5
        %v375 = vsel %vm279, %v370, %v374
        %v377 = vshrl.u32 %v260, 16
        %v379 = vrot.slane %v377, 4
        %v380 = vshll.u32 %v260, 16
        %v382 = vrot.slane %v380, 5
        %v383 = vor.u32 %v379, %v382
        %v384 = vrot.slane %v383, 4
        %v386 = vshll.u32 %v261, 16
        %v388 = vrot.slane %v386, 5
        %v389 = vsel %vm279, %v384, %v388
        %v390 = vshrl.u32 %v261, 16
        %v392 = vrot.slane %v390, 4
        %v393 = vor.u32 %v392, %v388
        %v394 = vrot.slane %v393, 4
        %v396 = vshll.u32 %v273, 16
        %v398 = vrot.slane %v396, 5
        %v399 = vsel %vm279, %v394, %v398
        %v401 = vshrl.u32 %v262, 16
        %v403 = vrot.slane %v401, 4
        %v404 = vshll.u32 %v262, 16
        %v406 = vrot.slane %v404, 5
        %v407 = vor.u32 %v403, %v406
        %v408 = vrot.slane %v407, 4
        %v410 = vshll.u32 %v263, 16
        %v412 = vrot.slane %v410, 5
        %v413 = vsel %vm279, %v408, %v412
        %v414 = vshrl.u32 %v263, 16
        %v416 = vrot.slane %v414, 4
        %v417 = vor.u32 %v416, %v412
        %v418 = vrot.slane %v417, 4
        %v420 = vshll.u32 %v274, 16
        %v422 = vrot.slane %v420, 5
        %v423 = vsel %vm279, %v418, %v422
        %v425 = vshrl.u32 %v264, 16
        %v427 = vrot.slane %v425, 4
        %v428 = vshll.u32 %v264, 16
        %v430 = vrot.slane %v428, 5
        %v431 = vor.u32 %v427, %v430
        %v432 = vrot.slane %v431, 4
        %v434 = vshll.u32 %v265, 16
        %v436 = vrot.slane %v434, 5
        %v437 = vsel %vm279, %v432, %v436
        %v438 = vshrl.u32 %v265, 16
        %v440 = vrot.slane %v438, 4
        %v441 = vor.u32 %v440, %v436
        %v442 = vrot.slane %v441, 4
        %v444 = vshll.u32 %v275, 16
        %v446 = vrot.slane %v444, 5
        %v447 = vsel %vm279, %v442, %v446
        %v449 = vshrl.u32 %v266, 16
        %v451 = vrot.slane %v449, 4
        %v452 = vshll.u32 %v266, 16
        %v454 = vrot.slane %v452, 5
        %v455 = vor.u32 %v451, %v454
        %v456 = vrot.slane %v455, 4
        %v458 = vshll.u32 %v267, 16
        %v460 = vrot.slane %v458, 5
        %v461 = vsel %vm279, %v456, %v460
        %v462 = vshrl.u32 %v267, 16
        %v464 = vrot.slane %v462, 4
        %v465 = vor.u32 %v464, %v460
        %v466 = vrot.slane %v465, 4
        %v468 = vshll.u32 %v276, 16
        %v470 = vrot.slane %v468, 5
        %v471 = vsel %vm279, %v466, %v470
        %s472 = scalar_lea.vmem %s3, 2
        %v473 = vld [vmem:[%s472] sm:$0x3]
        %v474 = vunpack.c.l.b16 %v293
        %v475 = vunpack.c.l.b16 %v303
        %v476 = vunpack.c.l.b16 %v317
        %v477 = vunpack.c.l.b16 %v327
        %v478 = vunpack.c.l.b16 %v341
        %v479 = vunpack.c.l.b16 %v351
        %v480 = vunpack.c.l.b16 %v365
        %v481 = vunpack.c.l.b16 %v375
        %v482 = vunpack.c.l.b16 %v389
        %v483 = vunpack.c.l.b16 %v399
        %v484 = vunpack.c.l.b16 %v413
        %v485 = vunpack.c.l.b16 %v423
        %v486 = vunpack.c.l.b16 %v437
        %v487 = vunpack.c.l.b16 %v447
        %v488 = vunpack.c.l.b16 %v461
        %v489 = vunpack.c.l.b16 %v471
        %v490 = vpack.c.b16 %v475, %v474
        %v491 = vpack.c.b16 %v477, %v476
        %v492 = vpack.c.b16 %v479, %v478
        %v493 = vpack.c.b16 %v481, %v480
        %v494 = vpack.c.b16 %v483, %v482
        %v495 = vpack.c.b16 %v485, %v484
        %v496 = vpack.c.b16 %v487, %v486
        %v497 = vpack.c.b16 %v489, %v488
        %vm498 = vcmask 31744
        %v500 = vsel %vm498, %v490, 0
        %v503 = vsel %vm498, %v491, 0
        %v506 = vsel %vm498, %v492, 0
        %v509 = vsel %vm498, %v493, 0
        %v512 = vsel %vm498, %v494, 0
        %v515 = vsel %vm498, %v495, 0
        %v518 = vsel %vm498, %v496, 0
        %v521 = vsel %vm498, %v497, 0
        %vm523 = vcmask 1041408
        %v525 = vsel %vm523, %v473, 0
        %527 = vmatpush.bf16.msra.mxu0 0
        %528 = vmatpush.bf16.msra.mxu0 0
        %529 = vmatpush.bf16.msra.mxu0 0
        %530 = vmatpush.bf16.msra.mxu0 0
        %531 = vmatpush.bf16.msra.mxu0 0
        %532 = vmatpush.bf16.msra.mxu0 0
        %533 = vmatpush.bf16.msra.mxu0 0
        %534 = vmatpush.bf16.msra.mxu0 %v525
        %535 = vmatmul.bf16.gmra.mxu0 %v500
        %v536 = vpop.f32.mrf.mxu0
        %v537 = vadd.f32 0.0, %v536
        %v538 = vpop.f32.mrf.mxu0
        %v539 = vadd.f32 0.0, %v538
        %540 = vmatmul.bf16.gmra.mxu0 %v503
        %v541 = vpop.f32.mrf.mxu0
        %v542 = vadd.f32 0.0, %v541
        %v543 = vpop.f32.mrf.mxu0
        %v544 = vadd.f32 0.0, %v543
        %545 = vmatmul.bf16.gmra.mxu0 %v506
        %v546 = vpop.f32.mrf.mxu0
        %v547 = vadd.f32 0.0, %v546
        %v548 = vpop.f32.mrf.mxu0
        %v549 = vadd.f32 0.0, %v548
        %550 = vmatmul.bf16.gmra.mxu0 %v509
        %v551 = vpop.f32.mrf.mxu0
        %v552 = vadd.f32 0.0, %v551
        %v553 = vpop.f32.mrf.mxu0
        %v554 = vadd.f32 0.0, %v553
        %555 = vmatmul.bf16.gmra.mxu0 %v512
        %v556 = vpop.f32.mrf.mxu0
        %v557 = vadd.f32 0.0, %v556
        %v558 = vpop.f32.mrf.mxu0
        %v559 = vadd.f32 0.0, %v558
        %560 = vmatmul.bf16.gmra.mxu0 %v515
        %v561 = vpop.f32.mrf.mxu0
        %v562 = vadd.f32 0.0, %v561
        %v563 = vpop.f32.mrf.mxu0
        %v564 = vadd.f32 0.0, %v563
        %565 = vmatmul.bf16.gmra.mxu0 %v518
        %v566 = vpop.f32.mrf.mxu0
        %v567 = vadd.f32 0.0, %v566
        %v568 = vpop.f32.mrf.mxu0
        %v569 = vadd.f32 0.0, %v568
        %570 = vmatmul.bf16.gmra.mxu0 %v521
        %v571 = vpop.f32.mrf.mxu0
        %v572 = vadd.f32 0.0, %v571
        %v573 = vpop.f32.mrf.mxu0
        %v574 = vadd.f32 0.0, %v573
        %575 = vdwg.mxu0
        %v592 = vunpack.c.l.b16 %v252
        %v593 = vunpack.c.l.b16 %v253
        %v594 = vunpack.c.l.b16 %v254
        %v595 = vunpack.c.l.b16 %v255
        %v596 = vunpack.c.l.b16 %v256
        %v597 = vunpack.c.l.b16 %v257
        %v598 = vunpack.c.l.b16 %v258
        %v599 = vunpack.c.l.b16 %v259
        %v600 = vunpack.c.l.b16 %v260
        %v601 = vunpack.c.l.b16 %v261
        %v602 = vunpack.c.l.b16 %v262
        %v603 = vunpack.c.l.b16 %v263
        %v604 = vunpack.c.l.b16 %v264
        %v605 = vunpack.c.l.b16 %v265
        %v606 = vunpack.c.l.b16 %v266
        %v607 = vunpack.c.l.b16 %v267
        %v608 = vpack.c.b16 %v593, %v592
        %v609 = vpack.c.b16 %v595, %v594
        %v610 = vpack.c.b16 %v597, %v596
        %v611 = vpack.c.b16 %v599, %v598
        %v612 = vpack.c.b16 %v601, %v600
        %v613 = vpack.c.b16 %v603, %v602
        %v614 = vpack.c.b16 %v605, %v604
        %v615 = vpack.c.b16 %v607, %v606
        %v617 = vsel %vm498, %v608, 0
        %v620 = vsel %vm498, %v609, 0
        %v623 = vsel %vm498, %v610, 0
        %v626 = vsel %vm498, %v611, 0
        %v629 = vsel %vm498, %v612, 0
        %v632 = vsel %vm498, %v613, 0
        %v635 = vsel %vm498, %v614, 0
        %v638 = vsel %vm498, %v615, 0
        %v641 = vsel %vm523, %v268, 0
        %643 = vmatpush.bf16.msra.mxu0 0
        %644 = vmatpush.bf16.msra.mxu0 0
        %645 = vmatpush.bf16.msra.mxu0 0
        %646 = vmatpush.bf16.msra.mxu0 0
        %647 = vmatpush.bf16.msra.mxu0 0
        %648 = vmatpush.bf16.msra.mxu0 0
        %649 = vmatpush.bf16.msra.mxu0 0
        %650 = vmatpush.bf16.msra.mxu0 %v641
        %651 = vmatmul.bf16.gmra.mxu0 %v617
        %v652 = vpop.f32.mrf.mxu0
        %v653 = vadd.f32 %v537, %v652
        %v654 = vpop.f32.mrf.mxu0
        %v655 = vadd.f32 %v539, %v654
        %656 = vmatmul.bf16.gmra.mxu0 %v620
        %v657 = vpop.f32.mrf.mxu0
        %v658 = vadd.f32 %v542, %v657
        %v659 = vpop.f32.mrf.mxu0
        %v660 = vadd.f32 %v544, %v659
        %661 = vmatmul.bf16.gmra.mxu0 %v623
        %v662 = vpop.f32.mrf.mxu0
        %v663 = vadd.f32 %v547, %v662
        %v664 = vpop.f32.mrf.mxu0
        %v665 = vadd.f32 %v549, %v664
        %666 = vmatmul.bf16.gmra.mxu0 %v626
        %v667 = vpop.f32.mrf.mxu0
        %v668 = vadd.f32 %v552, %v667
        %v669 = vpop.f32.mrf.mxu0
        %v670 = vadd.f32 %v554, %v669
        %671 = vmatmul.bf16.gmra.mxu0 %v629
        %v672 = vpop.f32.mrf.mxu0
        %v673 = vadd.f32 %v557, %v672
        %v674 = vpop.f32.mrf.mxu0
        %v675 = vadd.f32 %v559, %v674
        %676 = vmatmul.bf16.gmra.mxu0 %v632
        %v677 = vpop.f32.mrf.mxu0
        %v678 = vadd.f32 %v562, %v677
        %v679 = vpop.f32.mrf.mxu0
        %v680 = vadd.f32 %v564, %v679
        %681 = vmatmul.bf16.gmra.mxu0 %v635
        %v682 = vpop.f32.mrf.mxu0
        %v683 = vadd.f32 %v567, %v682
        %v684 = vpop.f32.mrf.mxu0
        %v685 = vadd.f32 %v569, %v684
        %686 = vmatmul.bf16.gmra.mxu0 %v638
        %v687 = vpop.f32.mrf.mxu0
        %v688 = vadd.f32 %v572, %v687
        %v689 = vpop.f32.mrf.mxu0
        %v690 = vadd.f32 %v574, %v689
        %691 = vdwg.mxu0
        %v692 = vld [vmem:[%s235] sm:$0xe]
        %v693 = vld [vmem:[%s235 + $0xc] sm:$0xe]
        %v694 = vld [vmem:[%s235 + $0x18] sm:$0xe]
        %v695 = vld [vmem:[%s235 + $0x24] sm:$0xe]
        %v696 = vld [vmem:[%s235 + $0x30] sm:$0xe]
        %v697 = vld [vmem:[%s235 + $0x3c] sm:$0xe]
        %v698 = vld [vmem:[%s235 + $0x48] sm:$0xe]
        %v699 = vld [vmem:[%s235 + $0x54] sm:$0xe]
        %vm716 = vcmask 1042432
        %vm717 = vcmask 1046532
        %vm718 = vmor %vm716, %vm717
        %v719 = vrot.slane %v692, 5
        %v720 = vrot.slane %v719, 4
        %v721 = vrot.slane %v253, 5
        %v722 = vsel %vm718, %v720, %v721
        %v723 = vrot.slane %v721, 4
        %v724 = vrot.slane %v269, 5
        %v725 = vsel %vm718, %v723, %v724
        %v726 = vrot.slane %v693, 5
        %v727 = vrot.slane %v726, 4
        %v728 = vrot.slane %v255, 5
        %v729 = vsel %vm718, %v727, %v728
        %v730 = vrot.slane %v728, 4
        %v731 = vrot.slane %v270, 5
        %v732 = vsel %vm718, %v730, %v731
        %v733 = vrot.slane %v694, 5
        %v734 = vrot.slane %v733, 4
        %v735 = vrot.slane %v257, 5
        %v736 = vsel %vm718, %v734, %v735
        %v737 = vrot.slane %v735, 4
        %v738 = vrot.slane %v271, 5
        %v739 = vsel %vm718, %v737, %v738
        %v740 = vrot.slane %v695, 5
        %v741 = vrot.slane %v740, 4
        %v742 = vrot.slane %v259, 5
        %v743 = vsel %vm718, %v741, %v742
        %v744 = vrot.slane %v742, 4
        %v745 = vrot.slane %v272, 5
        %v746 = vsel %vm718, %v744, %v745
        %v747 = vrot.slane %v696, 5
        %v748 = vrot.slane %v747, 4
        %v749 = vrot.slane %v261, 5
        %v750 = vsel %vm718, %v748, %v749
        %v751 = vrot.slane %v749, 4
        %v752 = vrot.slane %v273, 5
        %v753 = vsel %vm718, %v751, %v752
        %v754 = vrot.slane %v697, 5
        %v755 = vrot.slane %v754, 4
        %v756 = vrot.slane %v263, 5
        %v757 = vsel %vm718, %v755, %v756
        %v758 = vrot.slane %v756, 4
        %v759 = vrot.slane %v274, 5
        %v760 = vsel %vm718, %v758, %v759
        %v761 = vrot.slane %v698, 5
        %v762 = vrot.slane %v761, 4
        %v763 = vrot.slane %v265, 5
        %v764 = vsel %vm718, %v762, %v763
        %v765 = vrot.slane %v763, 4
        %v766 = vrot.slane %v275, 5
        %v767 = vsel %vm718, %v765, %v766
        %v768 = vrot.slane %v699, 5
        %v769 = vrot.slane %v768, 4
        %v770 = vrot.slane %v267, 5
        %v771 = vsel %vm718, %v769, %v770
        %v772 = vrot.slane %v770, 4
        %v773 = vrot.slane %v276, 5
        %v774 = vsel %vm718, %v772, %v773
        %s775 = scalar_lea.vmem %s3, 4
        %v776 = vld [vmem:[%s775] sm:$0x3]
        %v777 = vunpack.c.l.b16 %v722
        %v778 = vunpack.c.l.b16 %v725
        %v779 = vunpack.c.l.b16 %v729
        %v780 = vunpack.c.l.b16 %v732
        %v781 = vunpack.c.l.b16 %v736
        %v782 = vunpack.c.l.b16 %v739
        %v783 = vunpack.c.l.b16 %v743
        %v784 = vunpack.c.l.b16 %v746
        %v785 = vunpack.c.l.b16 %v750
        %v786 = vunpack.c.l.b16 %v753
        %v787 = vunpack.c.l.b16 %v757
        %v788 = vunpack.c.l.b16 %v760
        %v789 = vunpack.c.l.b16 %v764
        %v790 = vunpack.c.l.b16 %v767
        %v791 = vunpack.c.l.b16 %v771
        %v792 = vunpack.c.l.b16 %v774
        %v793 = vpack.c.b16 %v778, %v777
        %v794 = vpack.c.b16 %v780, %v779
        %v795 = vpack.c.b16 %v782, %v781
        %v796 = vpack.c.b16 %v784, %v783
        %v797 = vpack.c.b16 %v786, %v785
        %v798 = vpack.c.b16 %v788, %v787
        %v799 = vpack.c.b16 %v790, %v789
        %v800 = vpack.c.b16 %v792, %v791
        %v802 = vsel %vm498, %v793, 0
        %v805 = vsel %vm498, %v794, 0
        %v808 = vsel %vm498, %v795, 0
        %v811 = vsel %vm498, %v796, 0
        %v814 = vsel %vm498, %v797, 0
        %v817 = vsel %vm498, %v798, 0
        %v820 = vsel %vm498, %v799, 0
        %v823 = vsel %vm498, %v800, 0
        %v826 = vsel %vm523, %v776, 0
        %828 = vmatpush.bf16.msra.mxu0 0
        %829 = vmatpush.bf16.msra.mxu0 0
        %830 = vmatpush.bf16.msra.mxu0 0
        %831 = vmatpush.bf16.msra.mxu0 0
        %832 = vmatpush.bf16.msra.mxu0 0
        %833 = vmatpush.bf16.msra.mxu0 0
        %834 = vmatpush.bf16.msra.mxu0 0
        %835 = vmatpush.bf16.msra.mxu0 %v826
        %836 = vmatmul.bf16.gmra.mxu0 %v802
        %v837 = vpop.f32.mrf.mxu0
        %v838 = vadd.f32 0.0, %v837
        %v839 = vpop.f32.mrf.mxu0
        %v840 = vadd.f32 0.0, %v839
        %841 = vmatmul.bf16.gmra.mxu0 %v805
        %v842 = vpop.f32.mrf.mxu0
        %v843 = vadd.f32 0.0, %v842
        %v844 = vpop.f32.mrf.mxu0
        %v845 = vadd.f32 0.0, %v844
        %846 = vmatmul.bf16.gmra.mxu0 %v808
        %v847 = vpop.f32.mrf.mxu0
        %v848 = vadd.f32 0.0, %v847
        %v849 = vpop.f32.mrf.mxu0
        %v850 = vadd.f32 0.0, %v849
        %851 = vmatmul.bf16.gmra.mxu0 %v811
        %v852 = vpop.f32.mrf.mxu0
        %v853 = vadd.f32 0.0, %v852
        %v854 = vpop.f32.mrf.mxu0
        %v855 = vadd.f32 0.0, %v854
        %856 = vmatmul.bf16.gmra.mxu0 %v814
        %v857 = vpop.f32.mrf.mxu0
        %v858 = vadd.f32 0.0, %v857
        %v859 = vpop.f32.mrf.mxu0
        %v860 = vadd.f32 0.0, %v859
        %861 = vmatmul.bf16.gmra.mxu0 %v817
        %v862 = vpop.f32.mrf.mxu0
        %v863 = vadd.f32 0.0, %v862
        %v864 = vpop.f32.mrf.mxu0
        %v865 = vadd.f32 0.0, %v864
        %866 = vmatmul.bf16.gmra.mxu0 %v820
        %v867 = vpop.f32.mrf.mxu0
        %v868 = vadd.f32 0.0, %v867
        %v869 = vpop.f32.mrf.mxu0
        %v870 = vadd.f32 0.0, %v869
        %871 = vmatmul.bf16.gmra.mxu0 %v823
        %v872 = vpop.f32.mrf.mxu0
        %v873 = vadd.f32 0.0, %v872
        %v874 = vpop.f32.mrf.mxu0
        %v875 = vadd.f32 0.0, %v874
        %876 = vdwg.mxu0
        %v877 = vadd.f32 %v653, %v838
        %v878 = vadd.f32 %v655, %v840
        %v879 = vadd.f32 %v658, %v843
        %v880 = vadd.f32 %v660, %v845
        %v881 = vadd.f32 %v663, %v848
        %v882 = vadd.f32 %v665, %v850
        %v883 = vadd.f32 %v668, %v853
        %v884 = vadd.f32 %v670, %v855
        %v885 = vadd.f32 %v673, %v858
        %v886 = vadd.f32 %v675, %v860
        %v887 = vadd.f32 %v678, %v863
        %v888 = vadd.f32 %v680, %v865
        %v889 = vadd.f32 %v683, %v868
        %v890 = vadd.f32 %v685, %v870
        %v891 = vadd.f32 %v688, %v873
        %v892 = vadd.f32 %v690, %v875
        %v893 = vld [vmem:[%s242] sm:$0xf]
        %v894 = vld [vmem:[%s242 + $0x4] sm:$0xf]
        %v895 = vld [vmem:[%s242 + $0xc] sm:$0xf]
        %v896 = vld [vmem:[%s242 + $0x10] sm:$0xf]
        %v897 = vld [vmem:[%s242 + $0x18] sm:$0xf]
        %v898 = vld [vmem:[%s242 + $0x1c] sm:$0xf]
        %v899 = vld [vmem:[%s242 + $0x24] sm:$0xf]
        %v900 = vld [vmem:[%s242 + $0x28] sm:$0xf]
        %v901 = vld [vmem:[%s242 + $0x30] sm:$0xf]
        %v902 = vld [vmem:[%s242 + $0x34] sm:$0xf]
        %v903 = vld [vmem:[%s242 + $0x3c] sm:$0xf]
        %v904 = vld [vmem:[%s242 + $0x40] sm:$0xf]
        %v905 = vld [vmem:[%s242 + $0x48] sm:$0xf]
        %v906 = vld [vmem:[%s242 + $0x4c] sm:$0xf]
        %v907 = vld [vmem:[%s242 + $0x54] sm:$0xf]
        %v908 = vld [vmem:[%s242 + $0x58] sm:$0xf]
        %s909 = scalar_lea.vmem %s3, 6
        %v910 = vld [vmem:[%s909] sm:$0x3]
        %v927 = vunpack.c.l.b16 %v893
        %v928 = vunpack.c.l.b16 %v894
        %v929 = vunpack.c.l.b16 %v895
        %v930 = vunpack.c.l.b16 %v896
        %v931 = vunpack.c.l.b16 %v897
        %v932 = vunpack.c.l.b16 %v898
        %v933 = vunpack.c.l.b16 %v899
        %v934 = vunpack.c.l.b16 %v900
        %v935 = vunpack.c.l.b16 %v901
        %v936 = vunpack.c.l.b16 %v902
        %v937 = vunpack.c.l.b16 %v903
        %v938 = vunpack.c.l.b16 %v904
        %v939 = vunpack.c.l.b16 %v905
        %v940 = vunpack.c.l.b16 %v906
        %v941 = vunpack.c.l.b16 %v907
        %v942 = vunpack.c.l.b16 %v908
        %v943 = vpack.c.b16 %v928, %v927
        %v944 = vpack.c.b16 %v930, %v929
        %v945 = vpack.c.b16 %v932, %v931
        %v946 = vpack.c.b16 %v934, %v933
        %v947 = vpack.c.b16 %v936, %v935
        %v948 = vpack.c.b16 %v938, %v937
        %v949 = vpack.c.b16 %v940, %v939
        %v950 = vpack.c.b16 %v942, %v941
        %v952 = vsel %vm498, %v943, 0
        %v955 = vsel %vm498, %v944, 0
        %v958 = vsel %vm498, %v945, 0
        %v961 = vsel %vm498, %v946, 0
        %v964 = vsel %vm498, %v947, 0
        %v967 = vsel %vm498, %v948, 0
        %v970 = vsel %vm498, %v949, 0
        %v973 = vsel %vm498, %v950, 0
        %v976 = vsel %vm523, %v910, 0
        %978 = vmatpush.bf16.msra.mxu0 0
        %979 = vmatpush.bf16.msra.mxu0 0
        %980 = vmatpush.bf16.msra.mxu0 0
        %981 = vmatpush.bf16.msra.mxu0 0
        %982 = vmatpush.bf16.msra.mxu0 0
        %983 = vmatpush.bf16.msra.mxu0 0
        %984 = vmatpush.bf16.msra.mxu0 0
        %985 = vmatpush.bf16.msra.mxu0 %v976
        %986 = vmatmul.bf16.gmra.mxu0 %v952
        %v987 = vpop.f32.mrf.mxu0
        %v988 = vadd.f32 0.0, %v987
        %v989 = vpop.f32.mrf.mxu0
        %v990 = vadd.f32 0.0, %v989
        %991 = vmatmul.bf16.gmra.mxu0 %v955
        %v992 = vpop.f32.mrf.mxu0
        %v993 = vadd.f32 0.0, %v992
        %v994 = vpop.f32.mrf.mxu0
        %v995 = vadd.f32 0.0, %v994
        %996 = vmatmul.bf16.gmra.mxu0 %v958
        %v997 = vpop.f32.mrf.mxu0
        %v998 = vadd.f32 0.0, %v997
        %v999 = vpop.f32.mrf.mxu0
        %v1000 = vadd.f32 0.0, %v999
        %1001 = vmatmul.bf16.gmra.mxu0 %v961
        %v1002 = vpop.f32.mrf.mxu0
        %v1003 = vadd.f32 0.0, %v1002
        %v1004 = vpop.f32.mrf.mxu0
        %v1005 = vadd.f32 0.0, %v1004
        %1006 = vmatmul.bf16.gmra.mxu0 %v964
        %v1007 = vpop.f32.mrf.mxu0
        %v1008 = vadd.f32 0.0, %v1007
        %v1009 = vpop.f32.mrf.mxu0
        %v1010 = vadd.f32 0.0, %v1009
        %1011 = vmatmul.bf16.gmra.mxu0 %v967
        %v1012 = vpop.f32.mrf.mxu0
        %v1013 = vadd.f32 0.0, %v1012
        %v1014 = vpop.f32.mrf.mxu0
        %v1015 = vadd.f32 0.0, %v1014
        %1016 = vmatmul.bf16.gmra.mxu0 %v970
        %v1017 = vpop.f32.mrf.mxu0
        %v1018 = vadd.f32 0.0, %v1017
        %v1019 = vpop.f32.mrf.mxu0
        %v1020 = vadd.f32 0.0, %v1019
        %1021 = vmatmul.bf16.gmra.mxu0 %v973
        %v1022 = vpop.f32.mrf.mxu0
        %v1023 = vadd.f32 0.0, %v1022
        %v1024 = vpop.f32.mrf.mxu0
        %v1025 = vadd.f32 0.0, %v1024
        %1026 = vdwg.mxu0
        %v1027 = vadd.f32 %v877, %v988
        %v1028 = vadd.f32 %v878, %v990
        %v1029 = vadd.f32 %v879, %v993
        %v1030 = vadd.f32 %v880, %v995
        %v1031 = vadd.f32 %v881, %v998
        %v1032 = vadd.f32 %v882, %v1000
        %v1033 = vadd.f32 %v883, %v1003
        %v1034 = vadd.f32 %v884, %v1005
        %v1035 = vadd.f32 %v885, %v1008
        %v1036 = vadd.f32 %v886, %v1010
        %v1037 = vadd.f32 %v887, %v1013
        %v1038 = vadd.f32 %v888, %v1015
        %v1039 = vadd.f32 %v889, %v1018
        %v1040 = vadd.f32 %v890, %v1020
        %v1041 = vadd.f32 %v891, %v1023
        %v1042 = vadd.f32 %v892, %v1025
        %v1043 = vld [vmem:[%s242] sm:$0xf]
        %v1044 = vld [vmem:[%s242 + $0x4] sm:$0xf]
        %v1045 = vld [vmem:[%s242 + $0x8] sm:$0x1]
        %v1046 = vld [vmem:[%s242 + $0xc] sm:$0xf]
        %v1047 = vld [vmem:[%s242 + $0x10] sm:$0xf]
        %v1048 = vld [vmem:[%s242 + $0x14] sm:$0x1]
        %v1049 = vld [vmem:[%s242 + $0x18] sm:$0xf]
        %v1050 = vld [vmem:[%s242 + $0x1c] sm:$0xf]
        %v1051 = vld [vmem:[%s242 + $0x20] sm:$0x1]
        %v1052 = vld [vmem:[%s242 + $0x24] sm:$0xf]
        %v1053 = vld [vmem:[%s242 + $0x28] sm:$0xf]
        %v1054 = vld [vmem:[%s242 + $0x2c] sm:$0x1]
        %v1055 = vld [vmem:[%s242 + $0x30] sm:$0xf]
        %v1056 = vld [vmem:[%s242 + $0x34] sm:$0xf]
        %v1057 = vld [vmem:[%s242 + $0x38] sm:$0x1]
        %v1058 = vld [vmem:[%s242 + $0x3c] sm:$0xf]
        %v1059 = vld [vmem:[%s242 + $0x40] sm:$0xf]
        %v1060 = vld [vmem:[%s242 + $0x44] sm:$0x1]
        %v1061 = vld [vmem:[%s242 + $0x48] sm:$0xf]
        %v1062 = vld [vmem:[%s242 + $0x4c] sm:$0xf]
        %v1063 = vld [vmem:[%s242 + $0x50] sm:$0x1]
        %v1064 = vld [vmem:[%s242 + $0x54] sm:$0xf]
        %v1065 = vld [vmem:[%s242 + $0x58] sm:$0xf]
        %v1066 = vld [vmem:[%s242 + $0x5c] sm:$0x1]
        %v1068 = vshrl.u32 %v1043, 16
        %v1070 = vrot.slane %v1068, 4
        %v1071 = vshll.u32 %v1043, 16
        %v1073 = vrot.slane %v1071, 5
        %v1074 = vor.u32 %v1070, %v1073
        %v1075 = vrot.slane %v1074, 4
        %v1077 = vshll.u32 %v1044, 16
        %v1079 = vrot.slane %v1077, 5
        %v1080 = vsel %vm279, %v1075, %v1079
        %v1081 = vshrl.u32 %v1044, 16
        %v1083 = vrot.slane %v1081, 4
        %v1084 = vor.u32 %v1083, %v1079
        %v1085 = vrot.slane %v1084, 4
        %v1087 = vshll.u32 %v1045, 16
        %v1089 = vrot.slane %v1087, 5
        %v1090 = vsel %vm279, %v1085, %v1089
        %v1092 = vshrl.u32 %v1046, 16
        %v1094 = vrot.slane %v1092, 4
        %v1095 = vshll.u32 %v1046, 16
        %v1097 = vrot.slane %v1095, 5
        %v1098 = vor.u32 %v1094, %v1097
        %v1099 = vrot.slane %v1098, 4
        %v1101 = vshll.u32 %v1047, 16
        %v1103 = vrot.slane %v1101, 5
        %v1104 = vsel %vm279, %v1099, %v1103
        %v1105 = vshrl.u32 %v1047, 16
        %v1107 = vrot.slane %v1105, 4
        %v1108 = vor.u32 %v1107, %v1103
        %v1109 = vrot.slane %v1108, 4
        %v1111 = vshll.u32 %v1048, 16
        %v1113 = vrot.slane %v1111, 5
        %v1114 = vsel %vm279, %v1109, %v1113
        %v1116 = vshrl.u32 %v1049, 16
        %v1118 = vrot.slane %v1116, 4
        %v1119 = vshll.u32 %v1049, 16
        %v1121 = vrot.slane %v1119, 5
        %v1122 = vor.u32 %v1118, %v1121
        %v1123 = vrot.slane %v1122, 4
        %v1125 = vshll.u32 %v1050, 16
        %v1127 = vrot.slane %v1125, 5
        %v1128 = vsel %vm279, %v1123, %v1127
        %v1129 = vshrl.u32 %v1050, 16
        %v1131 = vrot.slane %v1129, 4
        %v1132 = vor.u32 %v1131, %v1127
        %v1133 = vrot.slane %v1132, 4
        %v1135 = vshll.u32 %v1051, 16
        %v1137 = vrot.slane %v1135, 5
        %v1138 = vsel %vm279, %v1133, %v1137
        %v1140 = vshrl.u32 %v1052, 16
        %v1142 = vrot.slane %v1140, 4
        %v1143 = vshll.u32 %v1052, 16
        %v1145 = vrot.slane %v1143, 5
        %v1146 = vor.u32 %v1142, %v1145
        %v1147 = vrot.slane %v1146, 4
        %v1149 = vshll.u32 %v1053, 16
        %v1151 = vrot.slane %v1149, 5
        %v1152 = vsel %vm279, %v1147, %v1151
        %v1153 = vshrl.u32 %v1053, 16
        %v1155 = vrot.slane %v1153, 4
        %v1156 = vor.u32 %v1155, %v1151
        %v1157 = vrot.slane %v1156, 4
        %v1159 = vshll.u32 %v1054, 16
        %v1161 = vrot.slane %v1159, 5
        %v1162 = vsel %vm279, %v1157, %v1161
        %v1164 = vshrl.u32 %v1055, 16
        %v1166 = vrot.slane %v1164, 4
        %v1167 = vshll.u32 %v1055, 16
        %v1169 = vrot.slane %v1167, 5
        %v1170 = vor.u32 %v1166, %v1169
        %v1171 = vrot.slane %v1170, 4
        %v1173 = vshll.u32 %v1056, 16
        %v1175 = vrot.slane %v1173, 5
        %v1176 = vsel %vm279, %v1171, %v1175
        %v1177 = vshrl.u32 %v1056, 16
        %v1179 = vrot.slane %v1177, 4
        %v1180 = vor.u32 %v1179, %v1175
        %v1181 = vrot.slane %v1180, 4
        %v1183 = vshll.u32 %v1057, 16
        %v1185 = vrot.slane %v1183, 5
        %v1186 = vsel %vm279, %v1181, %v1185
        %v1188 = vshrl.u32 %v1058, 16
        %v1190 = vrot.slane %v1188, 4
        %v1191 = vshll.u32 %v1058, 16
        %v1193 = vrot.slane %v1191, 5
        %v1194 = vor.u32 %v1190, %v1193
        %v1195 = vrot.slane %v1194, 4
        %v1197 = vshll.u32 %v1059, 16
        %v1199 = vrot.slane %v1197, 5
        %v1200 = vsel %vm279, %v1195, %v1199
        %v1201 = vshrl.u32 %v1059, 16
        %v1203 = vrot.slane %v1201, 4
        %v1204 = vor.u32 %v1203, %v1199
        %v1205 = vrot.slane %v1204, 4
        %v1207 = vshll.u32 %v1060, 16
        %v1209 = vrot.slane %v1207, 5
        %v1210 = vsel %vm279, %v1205, %v1209
        %v1212 = vshrl.u32 %v1061, 16
        %v1214 = vrot.slane %v1212, 4
        %v1215 = vshll.u32 %v1061, 16
        %v1217 = vrot.slane %v1215, 5
        %v1218 = vor.u32 %v1214, %v1217
        %v1219 = vrot.slane %v1218, 4
        %v1221 = vshll.u32 %v1062, 16
        %v1223 = vrot.slane %v1221, 5
        %v1224 = vsel %vm279, %v1219, %v1223
        %v1225 = vshrl.u32 %v1062, 16
        %v1227 = vrot.slane %v1225, 4
        %v1228 = vor.u32 %v1227, %v1223
        %v1229 = vrot.slane %v1228, 4
        %v1231 = vshll.u32 %v1063, 16
        %v1233 = vrot.slane %v1231, 5
        %v1234 = vsel %vm279, %v1229, %v1233
        %v1236 = vshrl.u32 %v1064, 16
        %v1238 = vrot.slane %v1236, 4
        %v1239 = vshll.u32 %v1064, 16
        %v1241 = vrot.slane %v1239, 5
        %v1242 = vor.u32 %v1238, %v1241
        %v1243 = vrot.slane %v1242, 4
        %v1245 = vshll.u32 %v1065, 16
        %v1247 = vrot.slane %v1245, 5
        %v1248 = vsel %vm279, %v1243, %v1247
        %v1249 = vshrl.u32 %v1065, 16
        %v1251 = vrot.slane %v1249, 4
        %v1252 = vor.u32 %v1251, %v1247
        %v1253 = vrot.slane %v1252, 4
        %v1255 = vshll.u32 %v1066, 16
        %v1257 = vrot.slane %v1255, 5
        %v1258 = vsel %vm279, %v1253, %v1257
        %s1259 = scalar_lea.vmem %s3, 8
        %v1260 = vld [vmem:[%s1259] sm:$0x3]
        %v1261 = vunpack.c.l.b16 %v1080
        %v1262 = vunpack.c.l.b16 %v1090
        %v1263 = vunpack.c.l.b16 %v1104
        %v1264 = vunpack.c.l.b16 %v1114
        %v1265 = vunpack.c.l.b16 %v1128
        %v1266 = vunpack.c.l.b16 %v1138
        %v1267 = vunpack.c.l.b16 %v1152
        %v1268 = vunpack.c.l.b16 %v1162
        %v1269 = vunpack.c.l.b16 %v1176
        %v1270 = vunpack.c.l.b16 %v1186
        %v1271 = vunpack.c.l.b16 %v1200
        %v1272 = vunpack.c.l.b16 %v1210
        %v1273 = vunpack.c.l.b16 %v1224
        %v1274 = vunpack.c.l.b16 %v1234
        %v1275 = vunpack.c.l.b16 %v1248
        %v1276 = vunpack.c.l.b16 %v1258
        %v1277 = vpack.c.b16 %v1262, %v1261
        %v1278 = vpack.c.b16 %v1264, %v1263
        %v1279 = vpack.c.b16 %v1266, %v1265
        %v1280 = vpack.c.b16 %v1268, %v1267
        %v1281 = vpack.c.b16 %v1270, %v1269
        %v1282 = vpack.c.b16 %v1272, %v1271
        %v1283 = vpack.c.b16 %v1274, %v1273
        %v1284 = vpack.c.b16 %v1276, %v1275
        %v1286 = vsel %vm498, %v1277, 0
        %v1289 = vsel %vm498, %v1278, 0
        %v1292 = vsel %vm498, %v1279, 0
        %v1295 = vsel %vm498, %v1280, 0
        %v1298 = vsel %vm498, %v1281, 0
        %v1301 = vsel %vm498, %v1282, 0
        %v1304 = vsel %vm498, %v1283, 0
        %v1307 = vsel %vm498, %v1284, 0
        %v1310 = vsel %vm523, %v1260, 0
        %1312 = vmatpush.bf16.msra.mxu0 0
        %1313 = vmatpush.bf16.msra.mxu0 0
        %1314 = vmatpush.bf16.msra.mxu0 0
        %1315 = vmatpush.bf16.msra.mxu0 0
        %1316 = vmatpush.bf16.msra.mxu0 0
        %1317 = vmatpush.bf16.msra.mxu0 0
        %1318 = vmatpush.bf16.msra.mxu0 0
        %1319 = vmatpush.bf16.msra.mxu0 %v1310
        %1320 = vmatmul.bf16.gmra.mxu0 %v1286
        %v1321 = vpop.f32.mrf.mxu0
        %v1322 = vadd.f32 0.0, %v1321
        %v1323 = vpop.f32.mrf.mxu0
        %v1324 = vadd.f32 0.0, %v1323
        %1325 = vmatmul.bf16.gmra.mxu0 %v1289
        %v1326 = vpop.f32.mrf.mxu0
        %v1327 = vadd.f32 0.0, %v1326
        %v1328 = vpop.f32.mrf.mxu0
        %v1329 = vadd.f32 0.0, %v1328
        %1330 = vmatmul.bf16.gmra.mxu0 %v1292
        %v1331 = vpop.f32.mrf.mxu0
        %v1332 = vadd.f32 0.0, %v1331
        %v1333 = vpop.f32.mrf.mxu0
        %v1334 = vadd.f32 0.0, %v1333
        %1335 = vmatmul.bf16.gmra.mxu0 %v1295
        %v1336 = vpop.f32.mrf.mxu0
        %v1337 = vadd.f32 0.0, %v1336
        %v1338 = vpop.f32.mrf.mxu0
        %v1339 = vadd.f32 0.0, %v1338
        %1340 = vmatmul.bf16.gmra.mxu0 %v1298
        %v1341 = vpop.f32.mrf.mxu0
        %v1342 = vadd.f32 0.0, %v1341
        %v1343 = vpop.f32.mrf.mxu0
        %v1344 = vadd.f32 0.0, %v1343
        %1345 = vmatmul.bf16.gmra.mxu0 %v1301
        %v1346 = vpop.f32.mrf.mxu0
        %v1347 = vadd.f32 0.0, %v1346
        %v1348 = vpop.f32.mrf.mxu0
        %v1349 = vadd.f32 0.0, %v1348
        %1350 = vmatmul.bf16.gmra.mxu0 %v1304
        %v1351 = vpop.f32.mrf.mxu0
        %v1352 = vadd.f32 0.0, %v1351
        %v1353 = vpop.f32.mrf.mxu0
        %v1354 = vadd.f32 0.0, %v1353
        %1355 = vmatmul.bf16.gmra.mxu0 %v1307
        %v1356 = vpop.f32.mrf.mxu0
        %v1357 = vadd.f32 0.0, %v1356
        %v1358 = vpop.f32.mrf.mxu0
        %v1359 = vadd.f32 0.0, %v1358
        %1360 = vdwg.mxu0
        %v1361 = vadd.f32 %v1027, %v1322
        %v1362 = vadd.f32 %v1028, %v1324
        %v1363 = vadd.f32 %v1029, %v1327
        %v1364 = vadd.f32 %v1030, %v1329
        %v1365 = vadd.f32 %v1031, %v1332
        %v1366 = vadd.f32 %v1032, %v1334
        %v1367 = vadd.f32 %v1033, %v1337
        %v1368 = vadd.f32 %v1034, %v1339
        %v1369 = vadd.f32 %v1035, %v1342
        %v1370 = vadd.f32 %v1036, %v1344
        %v1371 = vadd.f32 %v1037, %v1347
        %v1372 = vadd.f32 %v1038, %v1349
        %v1373 = vadd.f32 %v1039, %v1352
        %v1374 = vadd.f32 %v1040, %v1354
        %v1375 = vadd.f32 %v1041, %v1357
        %v1376 = vadd.f32 %v1042, %v1359
        %v1377 = vld [vmem:[%s242] sm:$0xe]
        %v1378 = vld [vmem:[%s242 + $0xc] sm:$0xe]
        %v1379 = vld [vmem:[%s242 + $0x18] sm:$0xe]
        %v1380 = vld [vmem:[%s242 + $0x24] sm:$0xe]
        %v1381 = vld [vmem:[%s242 + $0x30] sm:$0xe]
        %v1382 = vld [vmem:[%s242 + $0x3c] sm:$0xe]
        %v1383 = vld [vmem:[%s242 + $0x48] sm:$0xe]
        %v1384 = vld [vmem:[%s242 + $0x54] sm:$0xe]
        %v1409 = vrot.slane %v1377, 5
        %v1410 = vrot.slane %v1409, 4
        %v1411 = vrot.slane %v1044, 5
        %v1412 = vsel %vm718, %v1410, %v1411
        %v1413 = vrot.slane %v1411, 4
        %v1414 = vrot.slane %v1045, 5
        %v1415 = vsel %vm718, %v1413, %v1414
        %v1416 = vrot.slane %v1378, 5
        %v1417 = vrot.slane %v1416, 4
        %v1418 = vrot.slane %v1047, 5
        %v1419 = vsel %vm718, %v1417, %v1418
        %v1420 = vrot.slane %v1418, 4
        %v1421 = vrot.slane %v1048, 5
        %v1422 = vsel %vm718, %v1420, %v1421
        %v1423 = vrot.slane %v1379, 5
        %v1424 = vrot.slane %v1423, 4
        %v1425 = vrot.slane %v1050, 5
        %v1426 = vsel %vm718, %v1424, %v1425
        %v1427 = vrot.slane %v1425, 4
        %v1428 = vrot.slane %v1051, 5
        %v1429 = vsel %vm718, %v1427, %v1428
        %v1430 = vrot.slane %v1380, 5
        %v1431 = vrot.slane %v1430, 4
        %v1432 = vrot.slane %v1053, 5
        %v1433 = vsel %vm718, %v1431, %v1432
        %v1434 = vrot.slane %v1432, 4
        %v1435 = vrot.slane %v1054, 5
        %v1436 = vsel %vm718, %v1434, %v1435
        %v1437 = vrot.slane %v1381, 5
        %v1438 = vrot.slane %v1437, 4
        %v1439 = vrot.slane %v1056, 5
        %v1440 = vsel %vm718, %v1438, %v1439
        %v1441 = vrot.slane %v1439, 4
        %v1442 = vrot.slane %v1057, 5
        %v1443 = vsel %vm718, %v1441, %v1442
        %v1444 = vrot.slane %v1382, 5
        %v1445 = vrot.slane %v1444, 4
        %v1446 = vrot.slane %v1059, 5
        %v1447 = vsel %vm718, %v1445, %v1446
        %v1448 = vrot.slane %v1446, 4
        %v1449 = vrot.slane %v1060, 5
        %v1450 = vsel %vm718, %v1448, %v1449
        %v1451 = vrot.slane %v1383, 5
        %v1452 = vrot.slane %v1451, 4
        %v1453 = vrot.slane %v1062, 5
        %v1454 = vsel %vm718, %v1452, %v1453
        %v1455 = vrot.slane %v1453, 4
        %v1456 = vrot.slane %v1063, 5
        %v1457 = vsel %vm718, %v1455, %v1456
        %v1458 = vrot.slane %v1384, 5
        %v1459 = vrot.slane %v1458, 4
        %v1460 = vrot.slane %v1065, 5
        %v1461 = vsel %vm718, %v1459, %v1460
        %v1462 = vrot.slane %v1460, 4
        %v1463 = vrot.slane %v1066, 5
        %v1464 = vsel %vm718, %v1462, %v1463
        %s1465 = scalar_lea.vmem %s3, 10
        %v1466 = vld [vmem:[%s1465] sm:$0x3]
        %v1467 = vunpack.c.l.b16 %v1412
        %v1468 = vunpack.c.l.b16 %v1415
        %v1469 = vunpack.c.l.b16 %v1419
        %v1470 = vunpack.c.l.b16 %v1422
        %v1471 = vunpack.c.l.b16 %v1426
        %v1472 = vunpack.c.l.b16 %v1429
        %v1473 = vunpack.c.l.b16 %v1433
        %v1474 = vunpack.c.l.b16 %v1436
        %v1475 = vunpack.c.l.b16 %v1440
        %v1476 = vunpack.c.l.b16 %v1443
        %v1477 = vunpack.c.l.b16 %v1447
        %v1478 = vunpack.c.l.b16 %v1450
        %v1479 = vunpack.c.l.b16 %v1454
        %v1480 = vunpack.c.l.b16 %v1457
        %v1481 = vunpack.c.l.b16 %v1461
        %v1482 = vunpack.c.l.b16 %v1464
        %v1483 = vpack.c.b16 %v1468, %v1467
        %v1484 = vpack.c.b16 %v1470, %v1469
        %v1485 = vpack.c.b16 %v1472, %v1471
        %v1486 = vpack.c.b16 %v1474, %v1473
        %v1487 = vpack.c.b16 %v1476, %v1475
        %v1488 = vpack.c.b16 %v1478, %v1477
        %v1489 = vpack.c.b16 %v1480, %v1479
        %v1490 = vpack.c.b16 %v1482, %v1481
        %v1492 = vsel %vm498, %v1483, 0
        %v1495 = vsel %vm498, %v1484, 0
        %v1498 = vsel %vm498, %v1485, 0
        %v1501 = vsel %vm498, %v1486, 0
        %v1504 = vsel %vm498, %v1487, 0
        %v1507 = vsel %vm498, %v1488, 0
        %v1510 = vsel %vm498, %v1489, 0
        %v1513 = vsel %vm498, %v1490, 0
        %v1516 = vsel %vm523, %v1466, 0
        %1518 = vmatpush.bf16.msra.mxu0 0
        %1519 = vmatpush.bf16.msra.mxu0 0
        %1520 = vmatpush.bf16.msra.mxu0 0
        %1521 = vmatpush.bf16.msra.mxu0 0
        %1522 = vmatpush.bf16.msra.mxu0 0
        %1523 = vmatpush.bf16.msra.mxu0 0
        %1524 = vmatpush.bf16.msra.mxu0 0
        %1525 = vmatpush.bf16.msra.mxu0 %v1516
        %1526 = vmatmul.bf16.gmra.mxu0 %v1492
        %v1527 = vpop.f32.mrf.mxu0
        %v1528 = vadd.f32 0.0, %v1527
        %v1529 = vpop.f32.mrf.mxu0
        %v1530 = vadd.f32 0.0, %v1529
        %1531 = vmatmul.bf16.gmra.mxu0 %v1495
        %v1532 = vpop.f32.mrf.mxu0
        %v1533 = vadd.f32 0.0, %v1532
        %v1534 = vpop.f32.mrf.mxu0
        %v1535 = vadd.f32 0.0, %v1534
        %1536 = vmatmul.bf16.gmra.mxu0 %v1498
        %v1537 = vpop.f32.mrf.mxu0
        %v1538 = vadd.f32 0.0, %v1537
        %v1539 = vpop.f32.mrf.mxu0
        %v1540 = vadd.f32 0.0, %v1539
        %1541 = vmatmul.bf16.gmra.mxu0 %v1501
        %v1542 = vpop.f32.mrf.mxu0
        %v1543 = vadd.f32 0.0, %v1542
        %v1544 = vpop.f32.mrf.mxu0
        %v1545 = vadd.f32 0.0, %v1544
        %1546 = vmatmul.bf16.gmra.mxu0 %v1504
        %v1547 = vpop.f32.mrf.mxu0
        %v1548 = vadd.f32 0.0, %v1547
        %v1549 = vpop.f32.mrf.mxu0
        %v1550 = vadd.f32 0.0, %v1549
        %1551 = vmatmul.bf16.gmra.mxu0 %v1507
        %v1552 = vpop.f32.mrf.mxu0
        %v1553 = vadd.f32 0.0, %v1552
        %v1554 = vpop.f32.mrf.mxu0
        %v1555 = vadd.f32 0.0, %v1554
        %1556 = vmatmul.bf16.gmra.mxu0 %v1510
        %v1557 = vpop.f32.mrf.mxu0
        %v1558 = vadd.f32 0.0, %v1557
        %v1559 = vpop.f32.mrf.mxu0
        %v1560 = vadd.f32 0.0, %v1559
        %1561 = vmatmul.bf16.gmra.mxu0 %v1513
        %v1562 = vpop.f32.mrf.mxu0
        %v1563 = vadd.f32 0.0, %v1562
        %v1564 = vpop.f32.mrf.mxu0
        %v1565 = vadd.f32 0.0, %v1564
        %1566 = vdwg.mxu0
        %v1567 = vadd.f32 %v1361, %v1528
        %v1568 = vadd.f32 %v1362, %v1530
        %v1569 = vadd.f32 %v1363, %v1533
        %v1570 = vadd.f32 %v1364, %v1535
        %v1571 = vadd.f32 %v1365, %v1538
        %v1572 = vadd.f32 %v1366, %v1540
        %v1573 = vadd.f32 %v1367, %v1543
        %v1574 = vadd.f32 %v1368, %v1545
        %v1575 = vadd.f32 %v1369, %v1548
        %v1576 = vadd.f32 %v1370, %v1550
        %v1577 = vadd.f32 %v1371, %v1553
        %v1578 = vadd.f32 %v1372, %v1555
        %v1579 = vadd.f32 %v1373, %v1558
        %v1580 = vadd.f32 %v1374, %v1560
        %v1581 = vadd.f32 %v1375, %v1563
        %v1582 = vadd.f32 %v1376, %v1565
        %v1583 = vld [vmem:[%s249] sm:$0xf]
        %v1584 = vld [vmem:[%s249 + $0x4] sm:$0xf]
        %v1585 = vld [vmem:[%s249 + $0xc] sm:$0xf]
        %v1586 = vld [vmem:[%s249 + $0x10] sm:$0xf]
        %v1587 = vld [vmem:[%s249 + $0x18] sm:$0xf]
        %v1588 = vld [vmem:[%s249 + $0x1c] sm:$0xf]
        %v1589 = vld [vmem:[%s249 + $0x24] sm:$0xf]
        %v1590 = vld [vmem:[%s249 + $0x28] sm:$0xf]
        %v1591 = vld [vmem:[%s249 + $0x30] sm:$0xf]
        %v1592 = vld [vmem:[%s249 + $0x34] sm:$0xf]
        %v1593 = vld [vmem:[%s249 + $0x3c] sm:$0xf]
        %v1594 = vld [vmem:[%s249 + $0x40] sm:$0xf]
        %v1595 = vld [vmem:[%s249 + $0x48] sm:$0xf]
        %v1596 = vld [vmem:[%s249 + $0x4c] sm:$0xf]
        %v1597 = vld [vmem:[%s249 + $0x54] sm:$0xf]
        %v1598 = vld [vmem:[%s249 + $0x58] sm:$0xf]
        %s1599 = scalar_lea.vmem %s3, 12
        %v1600 = vld [vmem:[%s1599] sm:$0x3]
        %v1617 = vunpack.c.l.b16 %v1583
        %v1618 = vunpack.c.l.b16 %v1584
        %v1619 = vunpack.c.l.b16 %v1585
        %v1620 = vunpack.c.l.b16 %v1586
        %v1621 = vunpack.c.l.b16 %v1587
        %v1622 = vunpack.c.l.b16 %v1588
        %v1623 = vunpack.c.l.b16 %v1589
        %v1624 = vunpack.c.l.b16 %v1590
        %v1625 = vunpack.c.l.b16 %v1591
        %v1626 = vunpack.c.l.b16 %v1592
        %v1627 = vunpack.c.l.b16 %v1593
        %v1628 = vunpack.c.l.b16 %v1594
        %v1629 = vunpack.c.l.b16 %v1595
        %v1630 = vunpack.c.l.b16 %v1596
        %v1631 = vunpack.c.l.b16 %v1597
        %v1632 = vunpack.c.l.b16 %v1598
        %v1633 = vpack.c.b16 %v1618, %v1617
        %v1634 = vpack.c.b16 %v1620, %v1619
        %v1635 = vpack.c.b16 %v1622, %v1621
        %v1636 = vpack.c.b16 %v1624, %v1623
        %v1637 = vpack.c.b16 %v1626, %v1625
        %v1638 = vpack.c.b16 %v1628, %v1627
        %v1639 = vpack.c.b16 %v1630, %v1629
        %v1640 = vpack.c.b16 %v1632, %v1631
        %v1642 = vsel %vm498, %v1633, 0
        %v1645 = vsel %vm498, %v1634, 0
        %v1648 = vsel %vm498, %v1635, 0
        %v1651 = vsel %vm498, %v1636, 0
        %v1654 = vsel %vm498, %v1637, 0
        %v1657 = vsel %vm498, %v1638, 0
        %v1660 = vsel %vm498, %v1639, 0
        %v1663 = vsel %vm498, %v1640, 0
        %v1666 = vsel %vm523, %v1600, 0
        %1668 = vmatpush.bf16.msra.mxu0 0
        %1669 = vmatpush.bf16.msra.mxu0 0
        %1670 = vmatpush.bf16.msra.mxu0 0
        %1671 = vmatpush.bf16.msra.mxu0 0
        %1672 = vmatpush.bf16.msra.mxu0 0
        %1673 = vmatpush.bf16.msra.mxu0 0
        %1674 = vmatpush.bf16.msra.mxu0 0
        %1675 = vmatpush.bf16.msra.mxu0 %v1666
        %1676 = vmatmul.bf16.gmra.mxu0 %v1642
        %v1677 = vpop.f32.mrf.mxu0
        %v1678 = vadd.f32 0.0, %v1677
        %v1679 = vpop.f32.mrf.mxu0
        %v1680 = vadd.f32 0.0, %v1679
        %1681 = vmatmul.bf16.gmra.mxu0 %v1645
        %v1682 = vpop.f32.mrf.mxu0
        %v1683 = vadd.f32 0.0, %v1682
        %v1684 = vpop.f32.mrf.mxu0
        %v1685 = vadd.f32 0.0, %v1684
        %1686 = vmatmul.bf16.gmra.mxu0 %v1648
        %v1687 = vpop.f32.mrf.mxu0
        %v1688 = vadd.f32 0.0, %v1687
        %v1689 = vpop.f32.mrf.mxu0
        %v1690 = vadd.f32 0.0, %v1689
        %1691 = vmatmul.bf16.gmra.mxu0 %v1651
        %v1692 = vpop.f32.mrf.mxu0
        %v1693 = vadd.f32 0.0, %v1692
        %v1694 = vpop.f32.mrf.mxu0
        %v1695 = vadd.f32 0.0, %v1694
        %1696 = vmatmul.bf16.gmra.mxu0 %v1654
        %v1697 = vpop.f32.mrf.mxu0
        %v1698 = vadd.f32 0.0, %v1697
        %v1699 = vpop.f32.mrf.mxu0
        %v1700 = vadd.f32 0.0, %v1699
        %1701 = vmatmul.bf16.gmra.mxu0 %v1657
        %v1702 = vpop.f32.mrf.mxu0
        %v1703 = vadd.f32 0.0, %v1702
        %v1704 = vpop.f32.mrf.mxu0
        %v1705 = vadd.f32 0.0, %v1704
        %1706 = vmatmul.bf16.gmra.mxu0 %v1660
        %v1707 = vpop.f32.mrf.mxu0
        %v1708 = vadd.f32 0.0, %v1707
        %v1709 = vpop.f32.mrf.mxu0
        %v1710 = vadd.f32 0.0, %v1709
        %1711 = vmatmul.bf16.gmra.mxu0 %v1663
        %v1712 = vpop.f32.mrf.mxu0
        %v1713 = vadd.f32 0.0, %v1712
        %v1714 = vpop.f32.mrf.mxu0
        %v1715 = vadd.f32 0.0, %v1714
        %1716 = vdwg.mxu0
        %v1717 = vadd.f32 %v1567, %v1678
        %v1718 = vadd.f32 %v1568, %v1680
        %v1719 = vadd.f32 %v1569, %v1683
        %v1720 = vadd.f32 %v1570, %v1685
        %v1721 = vadd.f32 %v1571, %v1688
        %v1722 = vadd.f32 %v1572, %v1690
        %v1723 = vadd.f32 %v1573, %v1693
        %v1724 = vadd.f32 %v1574, %v1695
        %v1725 = vadd.f32 %v1575, %v1698
        %v1726 = vadd.f32 %v1576, %v1700
        %v1727 = vadd.f32 %v1577, %v1703
        %v1728 = vadd.f32 %v1578, %v1705
        %v1729 = vadd.f32 %v1579, %v1708
        %v1730 = vadd.f32 %v1580, %v1710
        %v1731 = vadd.f32 %v1581, %v1713
        %v1732 = vadd.f32 %v1582, %v1715
        %v1733 = vld [vmem:[%s249] sm:$0xf]
        %v1734 = vld [vmem:[%s249 + $0x4] sm:$0xf]
        %v1735 = vld [vmem:[%s249 + $0x8] sm:$0x1]
        %v1736 = vld [vmem:[%s249 + $0xc] sm:$0xf]
        %v1737 = vld [vmem:[%s249 + $0x10] sm:$0xf]
        %v1738 = vld [vmem:[%s249 + $0x14] sm:$0x1]
        %v1739 = vld [vmem:[%s249 + $0x18] sm:$0xf]
        %v1740 = vld [vmem:[%s249 + $0x1c] sm:$0xf]
        %v1741 = vld [vmem:[%s249 + $0x20] sm:$0x1]
        %v1742 = vld [vmem:[%s249 + $0x24] sm:$0xf]
        %v1743 = vld [vmem:[%s249 + $0x28] sm:$0xf]
        %v1744 = vld [vmem:[%s249 + $0x2c] sm:$0x1]
        %v1745 = vld [vmem:[%s249 + $0x30] sm:$0xf]
        %v1746 = vld [vmem:[%s249 + $0x34] sm:$0xf]
        %v1747 = vld [vmem:[%s249 + $0x38] sm:$0x1]
        %v1748 = vld [vmem:[%s249 + $0x3c] sm:$0xf]
        %v1749 = vld [vmem:[%s249 + $0x40] sm:$0xf]
        %v1750 = vld [vmem:[%s249 + $0x44] sm:$0x1]
        %v1751 = vld [vmem:[%s249 + $0x48] sm:$0xf]
        %v1752 = vld [vmem:[%s249 + $0x4c] sm:$0xf]
        %v1753 = vld [vmem:[%s249 + $0x50] sm:$0x1]
        %v1754 = vld [vmem:[%s249 + $0x54] sm:$0xf]
        %v1755 = vld [vmem:[%s249 + $0x58] sm:$0xf]
        %v1756 = vld [vmem:[%s249 + $0x5c] sm:$0x1]
        %v1758 = vshrl.u32 %v1733, 16
        %v1760 = vrot.slane %v1758, 4
        %v1761 = vshll.u32 %v1733, 16
        %v1763 = vrot.slane %v1761, 5
        %v1764 = vor.u32 %v1760, %v1763
        %v1765 = vrot.slane %v1764, 4
        %v1767 = vshll.u32 %v1734, 16
        %v1769 = vrot.slane %v1767, 5
        %v1770 = vsel %vm279, %v1765, %v1769
        %v1771 = vshrl.u32 %v1734, 16
        %v1773 = vrot.slane %v1771, 4
        %v1774 = vor.u32 %v1773, %v1769
        %v1775 = vrot.slane %v1774, 4
        %v1777 = vshll.u32 %v1735, 16
        %v1779 = vrot.slane %v1777, 5
        %v1780 = vsel %vm279, %v1775, %v1779
        %v1782 = vshrl.u32 %v1736, 16
        %v1784 = vrot.slane %v1782, 4
        %v1785 = vshll.u32 %v1736, 16
        %v1787 = vrot.slane %v1785, 5
        %v1788 = vor.u32 %v1784, %v1787
        %v1789 = vrot.slane %v1788, 4
        %v1791 = vshll.u32 %v1737, 16
        %v1793 = vrot.slane %v1791, 5
        %v1794 = vsel %vm279, %v1789, %v1793
        %v1795 = vshrl.u32 %v1737, 16
        %v1797 = vrot.slane %v1795, 4
        %v1798 = vor.u32 %v1797, %v1793
        %v1799 = vrot.slane %v1798, 4
        %v1801 = vshll.u32 %v1738, 16
        %v1803 = vrot.slane %v1801, 5
        %v1804 = vsel %vm279, %v1799, %v1803
        %v1806 = vshrl.u32 %v1739, 16
        %v1808 = vrot.slane %v1806, 4
        %v1809 = vshll.u32 %v1739, 16
        %v1811 = vrot.slane %v1809, 5
        %v1812 = vor.u32 %v1808, %v1811
        %v1813 = vrot.slane %v1812, 4
        %v1815 = vshll.u32 %v1740, 16
        %v1817 = vrot.slane %v1815, 5
        %v1818 = vsel %vm279, %v1813, %v1817
        %v1819 = vshrl.u32 %v1740, 16
        %v1821 = vrot.slane %v1819, 4
        %v1822 = vor.u32 %v1821, %v1817
        %v1823 = vrot.slane %v1822, 4
        %v1825 = vshll.u32 %v1741, 16
        %v1827 = vrot.slane %v1825, 5
        %v1828 = vsel %vm279, %v1823, %v1827
        %v1830 = vshrl.u32 %v1742, 16
        %v1832 = vrot.slane %v1830, 4
        %v1833 = vshll.u32 %v1742, 16
        %v1835 = vrot.slane %v1833, 5
        %v1836 = vor.u32 %v1832, %v1835
        %v1837 = vrot.slane %v1836, 4
        %v1839 = vshll.u32 %v1743, 16
        %v1841 = vrot.slane %v1839, 5
        %v1842 = vsel %vm279, %v1837, %v1841
        %v1843 = vshrl.u32 %v1743, 16
        %v1845 = vrot.slane %v1843, 4
        %v1846 = vor.u32 %v1845, %v1841
        %v1847 = vrot.slane %v1846, 4
        %v1849 = vshll.u32 %v1744, 16
        %v1851 = vrot.slane %v1849, 5
        %v1852 = vsel %vm279, %v1847, %v1851
        %v1854 = vshrl.u32 %v1745, 16
        %v1856 = vrot.slane %v1854, 4
        %v1857 = vshll.u32 %v1745, 16
        %v1859 = vrot.slane %v1857, 5
        %v1860 = vor.u32 %v1856, %v1859
        %v1861 = vrot.slane %v1860, 4
        %v1863 = vshll.u32 %v1746, 16
        %v1865 = vrot.slane %v1863, 5
        %v1866 = vsel %vm279, %v1861, %v1865
        %v1867 = vshrl.u32 %v1746, 16
        %v1869 = vrot.slane %v1867, 4
        %v1870 = vor.u32 %v1869, %v1865
        %v1871 = vrot.slane %v1870, 4
        %v1873 = vshll.u32 %v1747, 16
        %v1875 = vrot.slane %v1873, 5
        %v1876 = vsel %vm279, %v1871, %v1875
        %v1878 = vshrl.u32 %v1748, 16
        %v1880 = vrot.slane %v1878, 4
        %v1881 = vshll.u32 %v1748, 16
        %v1883 = vrot.slane %v1881, 5
        %v1884 = vor.u32 %v1880, %v1883
        %v1885 = vrot.slane %v1884, 4
        %v1887 = vshll.u32 %v1749, 16
        %v1889 = vrot.slane %v1887, 5
        %v1890 = vsel %vm279, %v1885, %v1889
        %v1891 = vshrl.u32 %v1749, 16
        %v1893 = vrot.slane %v1891, 4
        %v1894 = vor.u32 %v1893, %v1889
        %v1895 = vrot.slane %v1894, 4
        %v1897 = vshll.u32 %v1750, 16
        %v1899 = vrot.slane %v1897, 5
        %v1900 = vsel %vm279, %v1895, %v1899
        %v1902 = vshrl.u32 %v1751, 16
        %v1904 = vrot.slane %v1902, 4
        %v1905 = vshll.u32 %v1751, 16
        %v1907 = vrot.slane %v1905, 5
        %v1908 = vor.u32 %v1904, %v1907
        %v1909 = vrot.slane %v1908, 4
        %v1911 = vshll.u32 %v1752, 16
        %v1913 = vrot.slane %v1911, 5
        %v1914 = vsel %vm279, %v1909, %v1913
        %v1915 = vshrl.u32 %v1752, 16
        %v1917 = vrot.slane %v1915, 4
        %v1918 = vor.u32 %v1917, %v1913
        %v1919 = vrot.slane %v1918, 4
        %v1921 = vshll.u32 %v1753, 16
        %v1923 = vrot.slane %v1921, 5
        %v1924 = vsel %vm279, %v1919, %v1923
        %v1926 = vshrl.u32 %v1754, 16
        %v1928 = vrot.slane %v1926, 4
        %v1929 = vshll.u32 %v1754, 16
        %v1931 = vrot.slane %v1929, 5
        %v1932 = vor.u32 %v1928, %v1931
        %v1933 = vrot.slane %v1932, 4
        %v1935 = vshll.u32 %v1755, 16
        %v1937 = vrot.slane %v1935, 5
        %v1938 = vsel %vm279, %v1933, %v1937
        %v1939 = vshrl.u32 %v1755, 16
        %v1941 = vrot.slane %v1939, 4
        %v1942 = vor.u32 %v1941, %v1937
        %v1943 = vrot.slane %v1942, 4
        %v1945 = vshll.u32 %v1756, 16
        %v1947 = vrot.slane %v1945, 5
        %v1948 = vsel %vm279, %v1943, %v1947
        %s1949 = scalar_lea.vmem %s3, 14
        %v1950 = vld [vmem:[%s1949] sm:$0x3]
        %v1951 = vunpack.c.l.b16 %v1770
        %v1952 = vunpack.c.l.b16 %v1780
        %v1953 = vunpack.c.l.b16 %v1794
        %v1954 = vunpack.c.l.b16 %v1804
        %v1955 = vunpack.c.l.b16 %v1818
        %v1956 = vunpack.c.l.b16 %v1828
        %v1957 = vunpack.c.l.b16 %v1842
        %v1958 = vunpack.c.l.b16 %v1852
        %v1959 = vunpack.c.l.b16 %v1866
        %v1960 = vunpack.c.l.b16 %v1876
        %v1961 = vunpack.c.l.b16 %v1890
        %v1962 = vunpack.c.l.b16 %v1900
        %v1963 = vunpack.c.l.b16 %v1914
        %v1964 = vunpack.c.l.b16 %v1924
        %v1965 = vunpack.c.l.b16 %v1938
        %v1966 = vunpack.c.l.b16 %v1948
        %v1967 = vpack.c.b16 %v1952, %v1951
        %v1968 = vpack.c.b16 %v1954, %v1953
        %v1969 = vpack.c.b16 %v1956, %v1955
        %v1970 = vpack.c.b16 %v1958, %v1957
        %v1971 = vpack.c.b16 %v1960, %v1959
        %v1972 = vpack.c.b16 %v1962, %v1961
        %v1973 = vpack.c.b16 %v1964, %v1963
        %v1974 = vpack.c.b16 %v1966, %v1965
        %v1976 = vsel %vm498, %v1967, 0
        %v1979 = vsel %vm498, %v1968, 0
        %v1982 = vsel %vm498, %v1969, 0
        %v1985 = vsel %vm498, %v1970, 0
        %v1988 = vsel %vm498, %v1971, 0
        %v1991 = vsel %vm498, %v1972, 0
        %v1994 = vsel %vm498, %v1973, 0
        %v1997 = vsel %vm498, %v1974, 0
        %v2000 = vsel %vm523, %v1950, 0
        %2002 = vmatpush.bf16.msra.mxu0 0
        %2003 = vmatpush.bf16.msra.mxu0 0
        %2004 = vmatpush.bf16.msra.mxu0 0
        %2005 = vmatpush.bf16.msra.mxu0 0
        %2006 = vmatpush.bf16.msra.mxu0 0
        %2007 = vmatpush.bf16.msra.mxu0 0
        %2008 = vmatpush.bf16.msra.mxu0 0
        %2009 = vmatpush.bf16.msra.mxu0 %v2000
        %2010 = vmatmul.bf16.gmra.mxu0 %v1976
        %v2011 = vpop.f32.mrf.mxu0
        %v2012 = vadd.f32 0.0, %v2011
        %v2013 = vpop.f32.mrf.mxu0
        %v2014 = vadd.f32 0.0, %v2013
        %2015 = vmatmul.bf16.gmra.mxu0 %v1979
        %v2016 = vpop.f32.mrf.mxu0
        %v2017 = vadd.f32 0.0, %v2016
        %v2018 = vpop.f32.mrf.mxu0
        %v2019 = vadd.f32 0.0, %v2018
        %2020 = vmatmul.bf16.gmra.mxu0 %v1982
        %v2021 = vpop.f32.mrf.mxu0
        %v2022 = vadd.f32 0.0, %v2021
        %v2023 = vpop.f32.mrf.mxu0
        %v2024 = vadd.f32 0.0, %v2023
        %2025 = vmatmul.bf16.gmra.mxu0 %v1985
        %v2026 = vpop.f32.mrf.mxu0
        %v2027 = vadd.f32 0.0, %v2026
        %v2028 = vpop.f32.mrf.mxu0
        %v2029 = vadd.f32 0.0, %v2028
        %2030 = vmatmul.bf16.gmra.mxu0 %v1988
        %v2031 = vpop.f32.mrf.mxu0
        %v2032 = vadd.f32 0.0, %v2031
        %v2033 = vpop.f32.mrf.mxu0
        %v2034 = vadd.f32 0.0, %v2033
        %2035 = vmatmul.bf16.gmra.mxu0 %v1991
        %v2036 = vpop.f32.mrf.mxu0
        %v2037 = vadd.f32 0.0, %v2036
        %v2038 = vpop.f32.mrf.mxu0
        %v2039 = vadd.f32 0.0, %v2038
        %2040 = vmatmul.bf16.gmra.mxu0 %v1994
        %v2041 = vpop.f32.mrf.mxu0
        %v2042 = vadd.f32 0.0, %v2041
        %v2043 = vpop.f32.mrf.mxu0
        %v2044 = vadd.f32 0.0, %v2043
        %2045 = vmatmul.bf16.gmra.mxu0 %v1997
        %v2046 = vpop.f32.mrf.mxu0
        %v2047 = vadd.f32 0.0, %v2046
        %v2048 = vpop.f32.mrf.mxu0
        %v2049 = vadd.f32 0.0, %v2048
        %2050 = vdwg.mxu0
        %v2051 = vadd.f32 %v1717, %v2012
        %v2052 = vadd.f32 %v1718, %v2014
        %v2053 = vadd.f32 %v1719, %v2017
        %v2054 = vadd.f32 %v1720, %v2019
        %v2055 = vadd.f32 %v1721, %v2022
        %v2056 = vadd.f32 %v1722, %v2024
        %v2057 = vadd.f32 %v1723, %v2027
        %v2058 = vadd.f32 %v1724, %v2029
        %v2059 = vadd.f32 %v1725, %v2032
        %v2060 = vadd.f32 %v1726, %v2034
        %v2061 = vadd.f32 %v1727, %v2037
        %v2062 = vadd.f32 %v1728, %v2039
        %v2063 = vadd.f32 %v1729, %v2042
        %v2064 = vadd.f32 %v1730, %v2044
        %v2065 = vadd.f32 %v1731, %v2047
        %v2066 = vadd.f32 %v1732, %v2049
        %v2067 = vld [vmem:[%s249] sm:$0xe]
        %v2068 = vld [vmem:[%s249 + $0xc] sm:$0xe]
        %v2069 = vld [vmem:[%s249 + $0x18] sm:$0xe]
        %v2070 = vld [vmem:[%s249 + $0x24] sm:$0xe]
        %v2071 = vld [vmem:[%s249 + $0x30] sm:$0xe]
        %v2072 = vld [vmem:[%s249 + $0x3c] sm:$0xe]
        %v2073 = vld [vmem:[%s249 + $0x48] sm:$0xe]
        %v2074 = vld [vmem:[%s249 + $0x54] sm:$0xe]
        %v2099 = vrot.slane %v2067, 5
        %v2100 = vrot.slane %v2099, 4
        %v2101 = vrot.slane %v1734, 5
        %v2102 = vsel %vm718, %v2100, %v2101
        %v2103 = vrot.slane %v2101, 4
        %v2104 = vrot.slane %v1735, 5
        %v2105 = vsel %vm718, %v2103, %v2104
        %v2106 = vrot.slane %v2068, 5
        %v2107 = vrot.slane %v2106, 4
        %v2108 = vrot.slane %v1737, 5
        %v2109 = vsel %vm718, %v2107, %v2108
        %v2110 = vrot.slane %v2108, 4
        %v2111 = vrot.slane %v1738, 5
        %v2112 = vsel %vm718, %v2110, %v2111
        %v2113 = vrot.slane %v2069, 5
        %v2114 = vrot.slane %v2113, 4
        %v2115 = vrot.slane %v1740, 5
        %v2116 = vsel %vm718, %v2114, %v2115
        %v2117 = vrot.slane %v2115, 4
        %v2118 = vrot.slane %v1741, 5
        %v2119 = vsel %vm718, %v2117, %v2118
        %v2120 = vrot.slane %v2070, 5
        %v2121 = vrot.slane %v2120, 4
        %v2122 = vrot.slane %v1743, 5
        %v2123 = vsel %vm718, %v2121, %v2122
        %v2124 = vrot.slane %v2122, 4
        %v2125 = vrot.slane %v1744, 5
        %v2126 = vsel %vm718, %v2124, %v2125
        %v2127 = vrot.slane %v2071, 5
        %v2128 = vrot.slane %v2127, 4
        %v2129 = vrot.slane %v1746, 5
        %v2130 = vsel %vm718, %v2128, %v2129
        %v2131 = vrot.slane %v2129, 4
        %v2132 = vrot.slane %v1747, 5
        %v2133 = vsel %vm718, %v2131, %v2132
        %v2134 = vrot.slane %v2072, 5
        %v2135 = vrot.slane %v2134, 4
        %v2136 = vrot.slane %v1749, 5
        %v2137 = vsel %vm718, %v2135, %v2136
        %v2138 = vrot.slane %v2136, 4
        %v2139 = vrot.slane %v1750, 5
        %v2140 = vsel %vm718, %v2138, %v2139
        %v2141 = vrot.slane %v2073, 5
        %v2142 = vrot.slane %v2141, 4
        %v2143 = vrot.slane %v1752, 5
        %v2144 = vsel %vm718, %v2142, %v2143
        %v2145 = vrot.slane %v2143, 4
        %v2146 = vrot.slane %v1753, 5
        %v2147 = vsel %vm718, %v2145, %v2146
        %v2148 = vrot.slane %v2074, 5
        %v2149 = vrot.slane %v2148, 4
        %v2150 = vrot.slane %v1755, 5
        %v2151 = vsel %vm718, %v2149, %v2150
        %v2152 = vrot.slane %v2150, 4
        %v2153 = vrot.slane %v1756, 5
        %v2154 = vsel %vm718, %v2152, %v2153
        %s2155 = scalar_lea.vmem %s3, 16
        %v2156 = vld [vmem:[%s2155] sm:$0x3]
        %v2157 = vunpack.c.l.b16 %v2102
        %v2158 = vunpack.c.l.b16 %v2105
        %v2159 = vunpack.c.l.b16 %v2109
        %v2160 = vunpack.c.l.b16 %v2112
        %v2161 = vunpack.c.l.b16 %v2116
        %v2162 = vunpack.c.l.b16 %v2119
        %v2163 = vunpack.c.l.b16 %v2123
        %v2164 = vunpack.c.l.b16 %v2126
        %v2165 = vunpack.c.l.b16 %v2130
        %v2166 = vunpack.c.l.b16 %v2133
        %v2167 = vunpack.c.l.b16 %v2137
        %v2168 = vunpack.c.l.b16 %v2140
        %v2169 = vunpack.c.l.b16 %v2144
        %v2170 = vunpack.c.l.b16 %v2147
        %v2171 = vunpack.c.l.b16 %v2151
        %v2172 = vunpack.c.l.b16 %v2154
        %v2173 = vpack.c.b16 %v2158, %v2157
        %v2174 = vpack.c.b16 %v2160, %v2159
        %v2175 = vpack.c.b16 %v2162, %v2161
        %v2176 = vpack.c.b16 %v2164, %v2163
        %v2177 = vpack.c.b16 %v2166, %v2165
        %v2178 = vpack.c.b16 %v2168, %v2167
        %v2179 = vpack.c.b16 %v2170, %v2169
        %v2180 = vpack.c.b16 %v2172, %v2171
        %v2182 = vsel %vm498, %v2173, 0
        %v2185 = vsel %vm498, %v2174, 0
        %v2188 = vsel %vm498, %v2175, 0
        %v2191 = vsel %vm498, %v2176, 0
        %v2194 = vsel %vm498, %v2177, 0
        %v2197 = vsel %vm498, %v2178, 0
        %v2200 = vsel %vm498, %v2179, 0
        %v2203 = vsel %vm498, %v2180, 0
        %v2206 = vsel %vm523, %v2156, 0
        %2208 = vmatpush.bf16.msra.mxu0 0
        %2209 = vmatpush.bf16.msra.mxu0 0
        %2210 = vmatpush.bf16.msra.mxu0 0
        %2211 = vmatpush.bf16.msra.mxu0 0
        %2212 = vmatpush.bf16.msra.mxu0 0
        %2213 = vmatpush.bf16.msra.mxu0 0
        %2214 = vmatpush.bf16.msra.mxu0 0
        %2215 = vmatpush.bf16.msra.mxu0 %v2206
        %2216 = vmatmul.bf16.gmra.mxu0 %v2182
        %v2217 = vpop.f32.mrf.mxu0
        %v2218 = vadd.f32 0.0, %v2217
        %v2219 = vpop.f32.mrf.mxu0
        %v2220 = vadd.f32 0.0, %v2219
        %2221 = vmatmul.bf16.gmra.mxu0 %v2185
        %v2222 = vpop.f32.mrf.mxu0
        %v2223 = vadd.f32 0.0, %v2222
        %v2224 = vpop.f32.mrf.mxu0
        %v2225 = vadd.f32 0.0, %v2224
        %2226 = vmatmul.bf16.gmra.mxu0 %v2188
        %v2227 = vpop.f32.mrf.mxu0
        %v2228 = vadd.f32 0.0, %v2227
        %v2229 = vpop.f32.mrf.mxu0
        %v2230 = vadd.f32 0.0, %v2229
        %2231 = vmatmul.bf16.gmra.mxu0 %v2191
        %v2232 = vpop.f32.mrf.mxu0
        %v2233 = vadd.f32 0.0, %v2232
        %v2234 = vpop.f32.mrf.mxu0
        %v2235 = vadd.f32 0.0, %v2234
        %2236 = vmatmul.bf16.gmra.mxu0 %v2194
        %v2237 = vpop.f32.mrf.mxu0
        %v2238 = vadd.f32 0.0, %v2237
        %v2239 = vpop.f32.mrf.mxu0
        %v2240 = vadd.f32 0.0, %v2239
        %2241 = vmatmul.bf16.gmra.mxu0 %v2197
        %v2242 = vpop.f32.mrf.mxu0
        %v2243 = vadd.f32 0.0, %v2242
        %v2244 = vpop.f32.mrf.mxu0
        %v2245 = vadd.f32 0.0, %v2244
        %2246 = vmatmul.bf16.gmra.mxu0 %v2200
        %v2247 = vpop.f32.mrf.mxu0
        %v2248 = vadd.f32 0.0, %v2247
        %v2249 = vpop.f32.mrf.mxu0
        %v2250 = vadd.f32 0.0, %v2249
        %2251 = vmatmul.bf16.gmra.mxu0 %v2203
        %v2252 = vpop.f32.mrf.mxu0
        %v2253 = vadd.f32 0.0, %v2252
        %v2254 = vpop.f32.mrf.mxu0
        %v2255 = vadd.f32 0.0, %v2254
        %2256 = vdwg.mxu0
        %v2257 = vadd.f32 %v2051, %v2218
        %v2258 = vadd.f32 %v2052, %v2220
        %v2259 = vadd.f32 %v2053, %v2223
        %v2260 = vadd.f32 %v2054, %v2225
        %v2261 = vadd.f32 %v2055, %v2228
        %v2262 = vadd.f32 %v2056, %v2230
        %v2263 = vadd.f32 %v2057, %v2233
        %v2264 = vadd.f32 %v2058, %v2235
        %v2265 = vadd.f32 %v2059, %v2238
        %v2266 = vadd.f32 %v2060, %v2240
        %v2267 = vadd.f32 %v2061, %v2243
        %v2268 = vadd.f32 %v2062, %v2245
        %v2269 = vadd.f32 %v2063, %v2248
        %v2270 = vadd.f32 %v2064, %v2250
        %v2271 = vadd.f32 %v2065, %v2253
        %v2272 = vadd.f32 %v2066, %v2255
        %v2273 = vadd.f32 %v2257, %v2258
        %v2274 = vadd.f32 %v2273, %v2259
        %v2275 = vadd.f32 %v2274, %v2260
        %v2276 = vadd.f32 %v2275, %v2261
        %v2277 = vadd.f32 %v2276, %v2262
        %v2278 = vadd.f32 %v2277, %v2263
        %v2279 = vadd.f32 %v2278, %v2264
        %v2280 = vadd.f32 %v2279, %v2265
        %v2281 = vadd.f32 %v2280, %v2266
        %v2282 = vadd.f32 %v2281, %v2267
        %v2283 = vadd.f32 %v2282, %v2268
        %v2284 = vadd.f32 %v2283, %v2269
        %v2285 = vadd.f32 %v2284, %v2270
        %v2286 = vadd.f32 %v2285, %v2271
        %v2287 = vadd.f32 %v2286, %v2272
        %v2288 = vrot.slane %v2287, 4
        %v2289 = vadd.f32 %v2287, %v2288
        %v2290 = vrot.slane %v2289, 2
        %v2291 = vadd.f32 %v2289, %v2290
        %v2292 = vrot.slane %v2291, 1
        %v2293 = vadd.f32 %v2291, %v2292
        %v2294 = vmul.f32 %v2257, %v2257
        %v2295 = vmul.f32 %v2258, %v2258
        %v2296 = vmul.f32 %v2259, %v2259
        %v2297 = vmul.f32 %v2260, %v2260
        %v2298 = vmul.f32 %v2261, %v2261
        %v2299 = vmul.f32 %v2262, %v2262
        %v2300 = vmul.f32 %v2263, %v2263
        %v2301 = vmul.f32 %v2264, %v2264
        %v2302 = vmul.f32 %v2265, %v2265
        %v2303 = vmul.f32 %v2266, %v2266
        %v2304 = vmul.f32 %v2267, %v2267
        %v2305 = vmul.f32 %v2268, %v2268
        %v2306 = vmul.f32 %v2269, %v2269
        %v2307 = vmul.f32 %v2270, %v2270
        %v2308 = vmul.f32 %v2271, %v2271
        %v2309 = vmul.f32 %v2272, %v2272
        %v2310 = vadd.f32 %v2294, %v2295
        %v2311 = vadd.f32 %v2310, %v2296
        %v2312 = vadd.f32 %v2311, %v2297
        %v2313 = vadd.f32 %v2312, %v2298
        %v2314 = vadd.f32 %v2313, %v2299
        %v2315 = vadd.f32 %v2314, %v2300
        %v2316 = vadd.f32 %v2315, %v2301
        %v2317 = vadd.f32 %v2316, %v2302
        %v2318 = vadd.f32 %v2317, %v2303
        %v2319 = vadd.f32 %v2318, %v2304
        %v2320 = vadd.f32 %v2319, %v2305
        %v2321 = vadd.f32 %v2320, %v2306
        %v2322 = vadd.f32 %v2321, %v2307
        %v2323 = vadd.f32 %v2322, %v2308
        %v2324 = vadd.f32 %v2323, %v2309
        %v2325 = vrot.slane %v2324, 4
        %v2326 = vadd.f32 %v2324, %v2325
        %v2327 = vrot.slane %v2326, 2
        %v2328 = vadd.f32 %v2326, %v2327
        %v2329 = vrot.slane %v2328, 1
        %v2330 = vadd.f32 %v2328, %v2329
        %vm2331 = vcmask 1040384
        %v2332 = vsel %vm2331, %v2293, %v2330
        %2333 = vst [vmem:[%s229] sm:$0x3] %v2332
        %s2334 = sand.u32 %s125, 1
        %s2335 = scalar_lea.sflag [#allocation3], %s2334
        %s2336 = sand.u32 %s125, 1
        %s2337 = smul.addr %s2336, 2
        %s2338 = scalar_lea.vmem [#allocation2], %s2337
        // Predicated region
        $region37: #{tpu_custom_call.1} parent=35 // pred_check
          %p2339 = pneg %p135
        $region38: #{tpu_custom_call.1} parent=35 // pred_check_branch
          %2341 = sbr.rel (%p2339) target = $region40
        $region39: #{tpu_custom_call.1} parent=35 // pred_region
          %2343 = vsyncadd %s2335, 0
          %s2344 = smul.addr %s18, 2
          %s2345 = scalar_lea.hbm %s4, %s2344
          %s2347 = sshll.u32 %s2338, 4
          %s2348 = int_to_ptr.vmem [resolvable:$true] %s2347
          %s2349 = sshll.u32 %s2345, 4
          %s2350 = int_to_ptr.hbm [resolvable:$true] %s2349
          %2352 = dma.vmem_to_hbm [thread:$0]  %s2348, 32, %s2350, %s2335
        $region40: #{tpu_custom_call.1} parent=35 // pred_fallthru
          _
      $region36: #{tpu_custom_call.1} parent=5 // pred_fallthru
        _
      %p2353 = scmp.le.s32.totalorder 2, %s13
      // Predicated region
      $region41: #{tpu_custom_call.1} parent=5 // pred_check
        %p2354 = pneg %p2353
      $region42: #{tpu_custom_call.1} parent=5 // pred_check_branch
        %2356 = sbr.rel (%p2354) target = $region44
      $region43: #{tpu_custom_call.1} parent=5 // pred_region
        %s2357 = ssub.s32 %s13, 2
        // Predicated region
        $region45: #{tpu_custom_call.1} parent=43 // pred_check
          %p2358 = pneg %p141
        $region46: #{tpu_custom_call.1} parent=43 // pred_check_branch
          %2360 = sbr.rel (%p2358) target = $region48
        $region47: #{tpu_custom_call.1} parent=43 // pred_region
          %s2361 = sand.u32 %s126, 1
          %s2362 = scalar_lea.sflag [#allocation3], %s2361
          %s2363 = sand.u32 %s126, 1
          %s2364 = smul.addr %s2363, 2
          %s2365 = scalar_lea.vmem [#allocation2], %s2364
          %2367 = dma.done %s2362, 32
        $region48: #{tpu_custom_call.1} parent=43 // pred_fallthru
          _
      $region44: #{tpu_custom_call.1} parent=5 // pred_fallthru
        _
    $region6: #{tpu_custom_call.1} parent=1 // loop_footer
      %s17 = sadd.s32 1, %s13
    $region7: #{tpu_custom_call.1} parent=1 // loop_footer_branch
      %12 = sbr.rel target = $region3
    $region8: #{tpu_custom_call.1} parent=1 // loop_exit
      _
    %2368 = vsyncpa [#allocation3], 1
    %s2369 = scalar_lea.sflag [#allocation3], 1
    %2370 = vsyncpa %s2369, 1

</llo_original>
